<compile_context>
chip_gen: v7x
topology: tpu7x:2x2x1
jax: 0.10.0
libtpu: 0.0.40
codegen_flags: <defaults>
</compile_context>

<pallas_src>
import jax
import jax.numpy as jnp
from jax.experimental import pallas as pl
from jax.experimental.pallas import tpu as pltpu


def _round_up(x: int, m: int) -> int:
    return (x + m - 1) // m * m


def encoder_kernel(x_ref, w1_ref, b1_ref, w2_ref, b2_ref, out_ref):
    # x:  (TB, Kp) bf16   w1: (Kp, H) bf16   b1: (1, H)  f32
    # w2: (H, Lp)  bf16   b2: (1, Lp) f32    out: (TB, Lp) f32
    h = jnp.dot(x_ref[...], w1_ref[...], preferred_element_type=jnp.float32)
    h = jnp.maximum(h + b1_ref[...], 0.0)                      # bias + ReLU in f32 (VPU)
    out = jnp.dot(h.astype(jnp.bfloat16), w2_ref[...],
                  preferred_element_type=jnp.float32) + b2_ref[...]
    out_ref[...] = out.astype(out_ref.dtype)


def encoder_forward(x, w1, b1, w2, b2, *, tb: int = 512):
    """x: (B, C, H, W) float32. Weights stored as (in_features, out_features).

    Returns (B, latentDims) float32.
    """
    B = x.shape[0]
    xf = x.reshape(B, -1).astype(jnp.float32)      # torch.flatten(x, start_dim=1)
    K = xf.shape[1]                                # 784
    H = w1.shape[1]                                # 512 (already 128-aligned)
    L = w2.shape[1]                                # latentDims

    Kp = _round_up(K, 128)                         # 784 -> 896: aligned MXU K dim
    Lp = _round_up(max(L, 128), 128)               # lane-dense output (no vst.msk)
    TB = min(tb, _round_up(B, 8))                  # batch tile (multiple of 8)
    Bp = _round_up(B, TB)                          # pad batch to a whole tile count

    # Zero-pad + cast MXU operands to bf16 (f32 accumulation inside the kernel).
    x_p = jnp.zeros((Bp, Kp), jnp.bfloat16).at[:B, :K].set(xf.astype(jnp.bfloat16))
    w1_p = jnp.zeros((Kp, H), jnp.bfloat16).at[:K, :].set(w1.astype(jnp.bfloat16))
    w2_p = jnp.zeros((H, Lp), jnp.bfloat16).at[:, :L].set(w2.astype(jnp.bfloat16))
    b1_p = b1.reshape(1, H).astype(jnp.float32)
    b2_p = jnp.zeros((1, Lp), jnp.float32).at[:, :L].set(b2.reshape(1, L).astype(jnp.float32))

    out_padded = pl.pallas_call(
        encoder_kernel,
        out_shape=jax.ShapeDtypeStruct((Bp, Lp), jnp.float32),
        grid=(Bp // TB,),
        in_specs=[
            pl.BlockSpec((TB, Kp), lambda i: (i, 0)),   # activation tile (pipelined)
            pl.BlockSpec((Kp, H), lambda i: (0, 0)),    # w1: VMEM-resident
            pl.BlockSpec((1, H), lambda i: (0, 0)),     # b1
            pl.BlockSpec((H, Lp), lambda i: (0, 0)),    # w2
            pl.BlockSpec((1, Lp), lambda i: (0, 0)),    # b2
        ],
        out_specs=pl.BlockSpec((TB, Lp), lambda i: (i, 0)),
        compiler_params=pltpu.CompilerParams(
            dimension_semantics=("parallel",),          # shards across TCs on v7x
            vmem_limit_bytes=64 * 1024 * 1024,
        ),
    )(x_p, w1_p, b1_p, w2_p, b2_p)

    return out_padded[:B, :L]


def init_params(key, latent_dims: int):
    """Deterministic init mimicking nn.Linear's U(-1/sqrt(fan_in), 1/sqrt(fan_in))."""
    k1, k2, k3, k4 = jax.random.split(key, 4)
    lim1 = 1.0 / jnp.sqrt(784.0)
    lim2 = 1.0 / jnp.sqrt(512.0)
    # stored as (in_features, out_features) == torch weight transposed
    w1 = jax.random.uniform(k1, (784, 512), jnp.float32, -lim1, lim1)
    b1 = jax.random.uniform(k2, (512,), jnp.float32, -lim1, lim1)
    w2 = jax.random.uniform(k3, (512, latent_dims), jnp.float32, -lim2, lim2)
    b2 = jax.random.uniform(k4, (latent_dims,), jnp.float32, -lim2, lim2)
    return w1, b1, w2, b2


if __name__ == "__main__":
    latent_dims = 32
    key = jax.random.PRNGKey(0)
    kx, kp = jax.random.split(key)

    # MNIST-like input: batch=2, 1 channel, 28x28  ->  flatten to (2, 784)
    x = jax.random.normal(kx, (2, 1, 28, 28), jnp.float32)
    w1, b1, w2, b2 = init_params(kp, latent_dims)

    out = encoder_forward(x, w1, b1, w2, b2)
    out = jax.block_until_ready(out)
    assert out.shape == (2, latent_dims)

    # Reference in plain JAX with matching bf16-input / f32-accumulate math.
    xf = x.reshape(x.shape[0], -1)
    h_ref = jnp.dot(xf.astype(jnp.bfloat16), w1.astype(jnp.bfloat16),
                    preferred_element_type=jnp.float32) + b1
    h_ref = jnp.maximum(h_ref, 0.0)
    ref = jnp.dot(h_ref.astype(jnp.bfloat16), w2.astype(jnp.bfloat16),
                  preferred_element_type=jnp.float32) + b2
    assert jnp.allclose(out, ref, atol=1e-3, rtol=1e-3), "mismatch vs reference"

    # Loose sanity check against a pure-f32 reference (bf16 quantization error only).
    ref_f32 = jnp.maximum(xf @ w1 + b1, 0.0) @ w2 + b2
    assert jnp.allclose(out, ref_f32, atol=5e-2, rtol=5e-2), "mismatch vs f32 reference"

    print("KERNEL_OK")
</pallas_src>

<mosaic_0001>
module attributes {stable_mosaic.version = 11 : i64} {
  func.func @encoder_kernel(%arg0: i32, %arg1: memref<8x896xbf16, #tpu.memory_space<vmem>>, %arg2: memref<896x512xbf16, #tpu.memory_space<vmem>>, %arg3: memref<1x512xf32, #tpu.memory_space<vmem>>, %arg4: memref<512x128xbf16, #tpu.memory_space<vmem>>, %arg5: memref<1x128xf32, #tpu.memory_space<vmem>>, %arg6: memref<8x128xf32, #tpu.memory_space<vmem>>) attributes {dimension_semantics = [#tpu.dimension_semantics<parallel>], iteration_bounds = array<i64: 1>, scalar_prefetch = 0 : i64, scratch_operands = 0 : i64, tpu.core_type = #tpu.core_type<tc>, window_params = [{transform_indices = @transform_0, window_bounds = array<i64: 8, 896>}, {pipeline_mode = #tpu.pipeline_mode<synchronous>, transform_indices = @transform_1, window_bounds = array<i64: 896, 512>}, {pipeline_mode = #tpu.pipeline_mode<synchronous>, transform_indices = @transform_2, window_bounds = array<i64: 1, 512>}, {pipeline_mode = #tpu.pipeline_mode<synchronous>, transform_indices = @transform_3, window_bounds = array<i64: 512, 128>}, {pipeline_mode = #tpu.pipeline_mode<synchronous>, transform_indices = @transform_4, window_bounds = array<i64: 1, 128>}, {transform_indices = @transform_5, window_bounds = array<i64: 8, 128>}]} {
    %c0 = arith.constant 0 : index
    %c0_0 = arith.constant 0 : index
    %0 = vector.load %arg1[%c0, %c0_0] : memref<8x896xbf16, #tpu.memory_space<vmem>>, vector<8x896xbf16>
    %c0_1 = arith.constant 0 : index
    %c0_2 = arith.constant 0 : index
    %1 = vector.load %arg2[%c0_1, %c0_2] : memref<896x512xbf16, #tpu.memory_space<vmem>>, vector<896x512xbf16>
    %cst = arith.constant dense<0.000000e+00> : vector<8x512xf32>
    %2 = tpu.matmul %0, %1, %cst {dimension_numbers = #tpu.dot_dimension_numbers<[1], [0], [0], [1], [0, 0, 1, 1], [], []>} : vector<8x896xbf16>, vector<896x512xbf16>, vector<8x512xf32> -> vector<8x512xf32>
    %c0_3 = arith.constant 0 : index
    %c0_4 = arith.constant 0 : index
    %3 = vector.load %arg3[%c0_3, %c0_4] : memref<1x512xf32, #tpu.memory_space<vmem>>, vector<1x512xf32>
    %4 = vector.broadcast %3 : vector<1x512xf32> to vector<8x512xf32>
    %5 = arith.addf %2, %4 : vector<8x512xf32>
    %cst_5 = arith.constant 0.000000e+00 : f32
    %6 = vector.broadcast %cst_5 : f32 to vector<8x512xf32>
    %7 = arith.maximumf %5, %6 : vector<8x512xf32>
    %8 = arith.truncf %7 : vector<8x512xf32> to vector<8x512xbf16>
    %c0_6 = arith.constant 0 : index
    %c0_7 = arith.constant 0 : index
    %9 = vector.load %arg4[%c0_6, %c0_7] : memref<512x128xbf16, #tpu.memory_space<vmem>>, vector<512x128xbf16>
    %cst_8 = arith.constant dense<0.000000e+00> : vector<8x128xf32>
    %10 = tpu.matmul %8, %9, %cst_8 {dimension_numbers = #tpu.dot_dimension_numbers<[1], [0], [0], [1], [0, 0, 1, 1], [], []>} : vector<8x512xbf16>, vector<512x128xbf16>, vector<8x128xf32> -> vector<8x128xf32>
    %c0_9 = arith.constant 0 : index
    %c0_10 = arith.constant 0 : index
    %11 = vector.load %arg5[%c0_9, %c0_10] : memref<1x128xf32, #tpu.memory_space<vmem>>, vector<1x128xf32>
    %12 = vector.broadcast %11 : vector<1x128xf32> to vector<8x128xf32>
    %13 = arith.addf %10, %12 : vector<8x128xf32>
    %c0_11 = arith.constant 0 : index
    %c0_12 = arith.constant 0 : index
    %14 = vector.load %arg6[%c0_11, %c0_12] : memref<8x128xf32, #tpu.memory_space<vmem>>, vector<8x128xf32>
    tpu.vector_store %arg6[%c0_11, %c0_12], %13 {strides = array<i32>} : memref<8x128xf32, #tpu.memory_space<vmem>>, vector<8x128xf32>,
    return
  }
  func.func @transform_0(%arg0: i32) -> (i32, i32) {
    %c0_i32 = arith.constant 0 : i32
    %c0_i32_0 = arith.constant 0 : i32
    return %arg0, %c0_i32 : i32, i32
  }
  func.func @transform_1(%arg0: i32) -> (i32, i32) {
    %c0_i32 = arith.constant 0 : i32
    %c0_i32_0 = arith.constant 0 : i32
    %c0_i32_1 = arith.constant 0 : i32
    return %c0_i32, %c0_i32_0 : i32, i32
  }
  func.func @transform_2(%arg0: i32) -> (i32, i32) {
    %c0_i32 = arith.constant 0 : i32
    %c0_i32_0 = arith.constant 0 : i32
    %c0_i32_1 = arith.constant 0 : i32
    return %c0_i32, %c0_i32_0 : i32, i32
  }
  func.func @transform_3(%arg0: i32) -> (i32, i32) {
    %c0_i32 = arith.constant 0 : i32
    %c0_i32_0 = arith.constant 0 : i32
    %c0_i32_1 = arith.constant 0 : i32
    return %c0_i32, %c0_i32_0 : i32, i32
  }
  func.func @transform_4(%arg0: i32) -> (i32, i32) {
    %c0_i32 = arith.constant 0 : i32
    %c0_i32_0 = arith.constant 0 : i32
    %c0_i32_1 = arith.constant 0 : i32
    return %c0_i32, %c0_i32_0 : i32, i32
  }
  func.func @transform_5(%arg0: i32) -> (i32, i32) {
    %c0_i32 = arith.constant 0 : i32
    %c0_i32_0 = arith.constant 0 : i32
    return %arg0, %c0_i32 : i32, i32
  }
}

</mosaic_0001>

<llo_original>
// kernel: tpu_custom_call.1
$region0: #{tpu_custom_call.1}
  #allocation0 [shape = 'u32[]', space=smem, size = 0x4, offset = 0x4, fixed_abs, tag = 'smem constant byte address 0x4 - core index']
  #allocation1 [shape = 'u32[144,128]{1,0:T(1,128)}', space=vmem, size = 0x12000, scoped, tag = 'internal scratch']
  %s0 = inlined_call_operand.hbm [shape: bf16[8,896], index: 0, kind: input, shape index: {}]
  %s1 = inlined_call_operand.hbm [shape: bf16[896,512], index: 1, kind: input, shape index: {}]
  %s2 = inlined_call_operand.hbm [shape: f32[1,512], index: 2, kind: input, shape index: {}]
  %s3 = inlined_call_operand.hbm [shape: bf16[512,128], index: 3, kind: input, shape index: {}]
  %s4 = inlined_call_operand.hbm [shape: f32[1,128], index: 4, kind: input, shape index: {}]
  %s5 = inlined_call_operand.hbm [shape: f32[8,128], index: 5, kind: output, shape index: {}]
  %s6 = sld [smem:[#allocation0]]
  $region50: #{tpu_custom_call.1} parent=0
    _
  %s8 = ssub.s32 1, %s6
  %s9 = scalar_select 0, %s8, %s6
  $region1: #{tpu_custom_call.1} parent=0
    #allocation2 [shape = 'u8[14336]{0}', space=vmem, size = 0x3800, scoped, tag = 'input window, operand 0, single buffered']
    #allocation3 [shape = 's32[1]{0}', space=sflag, size = 0x4, scoped, tag = 'scoped memory for tpu_custom_call.1']
    #allocation4 [shape = 's32[1]{0}', space=sflag, size = 0x4, scoped, tag = 'scoped memory for tpu_custom_call.1']
    #allocation5 [shape = 'u8[917504]{0}', space=vmem, size = 0xe0000, scoped, tag = 'input window, operand 1, single buffered']
    #allocation6 [shape = 's32[1]{0}', space=sflag, size = 0x4, scoped, tag = 'scoped memory for tpu_custom_call.1']
    #allocation7 [shape = 'u8[2048]{0}', space=vmem, size = 0x800, scoped, tag = 'input window, operand 2, single buffered']
    #allocation8 [shape = 'u8[131072]{0}', space=vmem, size = 0x20000, scoped, tag = 'input window, operand 3, single buffered']
    #allocation9 [shape = 's32[1]{0}', space=sflag, size = 0x4, scoped, tag = 'scoped memory for tpu_custom_call.1']
    #allocation10 [shape = 'u8[512]{0}', space=vmem, size = 0x400, scoped, tag = 'input window, operand 4, single buffered']
    #allocation11 [shape = 'u8[4096]{0}', space=vmem, size = 0x1000, scoped, tag = 'output window, operand 0, single buffered']
    %10 = vsyncpa [#allocation3], 0
    %11 = vsyncpa [#allocation6], 0
    %12 = vsyncpa [#allocation9], 0
    %13 = vsyncpa [#allocation4], 0
    // Predicated region
    $region2: #{tpu_custom_call.1} parent=1 // pred_check
      _
    $region3: #{tpu_custom_call.1} parent=1 // pred_check_branch
      %15 = sbr.rel (0) target = $region5
    $region4: #{tpu_custom_call.1} parent=1 // pred_region
      %s17 = ssub.s32 448, 448
      %18 = vsyncadd [#allocation3], %s17
      %s20 = sshll.u32 [#allocation2], 4
      %s21 = int_to_ptr.vmem [resolvable:$true] %s20
      %23 = dma.hbm_to_vmem [thread:$0]  %s0, 448, %s21, [#allocation3]
    $region5: #{tpu_custom_call.1} parent=1 // pred_fallthru
      _
    // Predicated region
    $region6: #{tpu_custom_call.1} parent=1 // pred_check
      _
    $region7: #{tpu_custom_call.1} parent=1 // pred_check_branch
      %25 = sbr.rel (0) target = $region9
    $region8: #{tpu_custom_call.1} parent=1 // pred_region
      %s27 = ssub.s32 28672, 28672
      %28 = vsyncadd [#allocation6], %s27
      %s29 = sshll.u32 [#allocation5], 4
      %s30 = int_to_ptr.vmem [resolvable:$true] %s29
      %35 = dma.hbm_to_vmem [thread:$0]  %s1, 28672, %s30, [#allocation6], 256, 256, 16
    $region9: #{tpu_custom_call.1} parent=1 // pred_fallthru
      _
    // Predicated region
    $region10: #{tpu_custom_call.1} parent=1 // pred_check
      _
    $region11: #{tpu_custom_call.1} parent=1 // pred_check_branch
      %37 = sbr.rel (0) target = $region13
    $region12: #{tpu_custom_call.1} parent=1 // pred_region
      %s39 = ssub.s32 64, 64
      %40 = vsyncadd [#allocation6], %s39
      %s42 = sshll.u32 [#allocation7], 4
      %s43 = int_to_ptr.vmem [resolvable:$true] %s42
      %45 = dma.hbm_to_vmem [thread:$0]  %s2, 64, %s43, [#allocation6]
    $region13: #{tpu_custom_call.1} parent=1 // pred_fallthru
      _
    // Predicated region
    $region14: #{tpu_custom_call.1} parent=1 // pred_check
      _
    $region15: #{tpu_custom_call.1} parent=1 // pred_check_branch
      %47 = sbr.rel (0) target = $region17
    $region16: #{tpu_custom_call.1} parent=1 // pred_region
      %s49 = ssub.s32 4096, 4096
      %50 = vsyncadd [#allocation9], %s49
      %s51 = sshll.u32 [#allocation8], 4
      %s52 = int_to_ptr.vmem [resolvable:$true] %s51
      %57 = dma.hbm_to_vmem [thread:$0]  %s3, 4096, %s52, [#allocation9], 64, 64, 4
    $region17: #{tpu_custom_call.1} parent=1 // pred_fallthru
      _
    // Predicated region
    $region18: #{tpu_custom_call.1} parent=1 // pred_check
      _
    $region19: #{tpu_custom_call.1} parent=1 // pred_check_branch
      %59 = sbr.rel (0) target = $region21
    $region20: #{tpu_custom_call.1} parent=1 // pred_region
      %s61 = ssub.s32 16, 16
      %62 = vsyncadd [#allocation9], %s61
      %s64 = sshll.u32 [#allocation10], 4
      %s65 = int_to_ptr.vmem [resolvable:$true] %s64
      %67 = dma.hbm_to_vmem [thread:$0]  %s4, 16, %s65, [#allocation9]
    $region21: #{tpu_custom_call.1} parent=1 // pred_fallthru
      _
    // Predicated region
    $region22: #{tpu_custom_call.1} parent=1 // pred_check
      _
    $region23: #{tpu_custom_call.1} parent=1 // pred_check_branch
      %69 = sbr.rel (0) target = $region25
    $region24: #{tpu_custom_call.1} parent=1 // pred_region
      %70 = dma.done [#allocation3], 448
    $region25: #{tpu_custom_call.1} parent=1 // pred_fallthru
      _
    // Predicated region
    $region26: #{tpu_custom_call.1} parent=1 // pred_check
      _
    $region27: #{tpu_custom_call.1} parent=1 // pred_check_branch
      %72 = sbr.rel (0) target = $region29
    $region28: #{tpu_custom_call.1} parent=1 // pred_region
      %73 = dma.done [#allocation6], 28672
    $region29: #{tpu_custom_call.1} parent=1 // pred_fallthru
      _
    // Predicated region
    $region30: #{tpu_custom_call.1} parent=1 // pred_check
      _
    $region31: #{tpu_custom_call.1} parent=1 // pred_check_branch
      %75 = sbr.rel (0) target = $region33
    $region32: #{tpu_custom_call.1} parent=1 // pred_region
      %76 = dma.done [#allocation6], 64
    $region33: #{tpu_custom_call.1} parent=1 // pred_fallthru
      _
    // Predicated region
    $region34: #{tpu_custom_call.1} parent=1 // pred_check
      _
    $region35: #{tpu_custom_call.1} parent=1 // pred_check_branch
      %78 = sbr.rel (0) target = $region37
    $region36: #{tpu_custom_call.1} parent=1 // pred_region
      %79 = dma.done [#allocation9], 4096
    $region37: #{tpu_custom_call.1} parent=1 // pred_fallthru
      _
    // Predicated region
    $region38: #{tpu_custom_call.1} parent=1 // pred_check
      _
    $region39: #{tpu_custom_call.1} parent=1 // pred_check_branch
      %81 = sbr.rel (0) target = $region41
    $region40: #{tpu_custom_call.1} parent=1 // pred_region
      %82 = dma.done [#allocation9], 16
    $region41: #{tpu_custom_call.1} parent=1 // pred_fallthru
      _
    %v84 = vld [vmem:[#allocation2] sm:$0xff]
    %v85 = vld [vmem:[#allocation2 + $0x8] sm:$0xff]
    %v86 = vld [vmem:[#allocation2 + $0x10] sm:$0xff]
    %v87 = vld [vmem:[#allocation2 + $0x18] sm:$0xf]
    %v88 = vld [vmem:[#allocation5] sm:$0xff]
    %v89 = vld [vmem:[#allocation5 + $0x8] sm:$0xff]
    %v90 = vld [vmem:[#allocation5 + $0x10] sm:$0xff]
    %v91 = vld [vmem:[#allocation5 + $0x18] sm:$0xff]
    %v92 = vld [vmem:[#allocation5 + $0x20] sm:$0xff]
    %v93 = vld [vmem:[#allocation5 + $0x28] sm:$0xff]
    %v94 = vld [vmem:[#allocation5 + $0x30] sm:$0xff]
    %v95 = vld [vmem:[#allocation5 + $0x38] sm:$0xff]
    %v96 = vld [vmem:[#allocation5 + $0x40] sm:$0xff]
    %v97 = vld [vmem:[#allocation5 + $0x48] sm:$0xff]
    %v98 = vld [vmem:[#allocation5 + $0x50] sm:$0xff]
    %v99 = vld [vmem:[#allocation5 + $0x58] sm:$0xff]
    %v100 = vld [vmem:[#allocation5 + $0x60] sm:$0xff]
    %v101 = vld [vmem:[#allocation5 + $0x68] sm:$0xff]
    %v102 = vld [vmem:[#allocation5 + $0x70] sm:$0xff]
    %v103 = vld [vmem:[#allocation5 + $0x78] sm:$0xff]
    %v104 = vld [vmem:[#allocation5 + $0x80] sm:$0xff]
    %v105 = vld [vmem:[#allocation5 + $0x88] sm:$0xff]
    %v106 = vld [vmem:[#allocation5 + $0x90] sm:$0xff]
    %v107 = vld [vmem:[#allocation5 + $0x98] sm:$0xff]
    %v108 = vld [vmem:[#allocation5 + $0xa0] sm:$0xff]
    %v109 = vld [vmem:[#allocation5 + $0xa8] sm:$0xff]
    %v110 = vld [vmem:[#allocation5 + $0xb0] sm:$0xff]
    %v111 = vld [vmem:[#allocation5 + $0xb8] sm:$0xff]
    %v112 = vld [vmem:[#allocation5 + $0xc0] sm:$0xff]
    %v113 = vld [vmem:[#allocation5 + $0xc8] sm:$0xff]
    %v114 = vld [vmem:[#allocation5 + $0xd0] sm:$0xff]
    %v115 = vld [vmem:[#allocation5 + $0xd8] sm:$0xff]
    %v116 = vld [vmem:[#allocation5 + $0xe0] sm:$0xff]
    %v117 = vld [vmem:[#allocation5 + $0xe8] sm:$0xff]
    %v118 = vld [vmem:[#allocation5 + $0xf0] sm:$0xff]
    %v119 = vld [vmem:[#allocation5 + $0xf8] sm:$0xff]
    %v120 = vld [vmem:[#allocation5 + $0x100] sm:$0xff]
    %v121 = vld [vmem:[#allocation5 + $0x108] sm:$0xff]
    %v122 = vld [vmem:[#allocation5 + $0x110] sm:$0xff]
    %v123 = vld [vmem:[#allocation5 + $0x118] sm:$0xff]
    %v124 = vld [vmem:[#allocation5 + $0x120] sm:$0xff]
    %v125 = vld [vmem:[#allocation5 + $0x128] sm:$0xff]
    %v126 = vld [vmem:[#allocation5 + $0x130] sm:$0xff]
    %v127 = vld [vmem:[#allocation5 + $0x138] sm:$0xff]
    %v128 = vld [vmem:[#allocation5 + $0x140] sm:$0xff]
    %v129 = vld [vmem:[#allocation5 + $0x148] sm:$0xff]
    %v130 = vld [vmem:[#allocation5 + $0x150] sm:$0xff]
    %v131 = vld [vmem:[#allocation5 + $0x158] sm:$0xff]
    %v132 = vld [vmem:[#allocation5 + $0x160] sm:$0xff]
    %v133 = vld [vmem:[#allocation5 + $0x168] sm:$0xff]
    %v134 = vld [vmem:[#allocation5 + $0x170] sm:$0xff]
    %v135 = vld [vmem:[#allocation5 + $0x178] sm:$0xff]
    %v136 = vld [vmem:[#allocation5 + $0x180] sm:$0xff]
    %v137 = vld [vmem:[#allocation5 + $0x188] sm:$0xff]
    %v138 = vld [vmem:[#allocation5 + $0x190] sm:$0xff]
    %v139 = vld [vmem:[#allocation5 + $0x198] sm:$0xff]
    %v140 = vld [vmem:[#allocation5 + $0x1a0] sm:$0xff]
    %v141 = vld [vmem:[#allocation5 + $0x1a8] sm:$0xff]
    %v142 = vld [vmem:[#allocation5 + $0x1b0] sm:$0xff]
    %v143 = vld [vmem:[#allocation5 + $0x1b8] sm:$0xff]
    %v144 = vld [vmem:[#allocation5 + $0x1c0] sm:$0xff]
    %v145 = vld [vmem:[#allocation5 + $0x1c8] sm:$0xff]
    %v146 = vld [vmem:[#allocation5 + $0x1d0] sm:$0xff]
    %v147 = vld [vmem:[#allocation5 + $0x1d8] sm:$0xff]
    %v148 = vld [vmem:[#allocation5 + $0x1e0] sm:$0xff]
    %v149 = vld [vmem:[#allocation5 + $0x1e8] sm:$0xff]
    %v150 = vld [vmem:[#allocation5 + $0x1f0] sm:$0xff]
    %v151 = vld [vmem:[#allocation5 + $0x1f8] sm:$0xff]
    %v152 = vld [vmem:[#allocation5 + $0x200] sm:$0xff]
    %v153 = vld [vmem:[#allocation5 + $0x208] sm:$0xff]
    %v154 = vld [vmem:[#allocation5 + $0x210] sm:$0xff]
    %v155 = vld [vmem:[#allocation5 + $0x218] sm:$0xff]
    %v156 = vld [vmem:[#allocation5 + $0x220] sm:$0xff]
    %v157 = vld [vmem:[#allocation5 + $0x228] sm:$0xff]
    %v158 = vld [vmem:[#allocation5 + $0x230] sm:$0xff]
    %v159 = vld [vmem:[#allocation5 + $0x238] sm:$0xff]
    %v160 = vld [vmem:[#allocation5 + $0x240] sm:$0xff]
    %v161 = vld [vmem:[#allocation5 + $0x248] sm:$0xff]
    %v162 = vld [vmem:[#allocation5 + $0x250] sm:$0xff]
    %v163 = vld [vmem:[#allocation5 + $0x258] sm:$0xff]
    %v164 = vld [vmem:[#allocation5 + $0x260] sm:$0xff]
    %v165 = vld [vmem:[#allocation5 + $0x268] sm:$0xff]
    %v166 = vld [vmem:[#allocation5 + $0x270] sm:$0xff]
    %v167 = vld [vmem:[#allocation5 + $0x278] sm:$0xff]
    %v168 = vld [vmem:[#allocation5 + $0x280] sm:$0xff]
    %v169 = vld [vmem:[#allocation5 + $0x288] sm:$0xff]
    %v170 = vld [vmem:[#allocation5 + $0x290] sm:$0xff]
    %v171 = vld [vmem:[#allocation5 + $0x298] sm:$0xff]
    %v172 = vld [vmem:[#allocation5 + $0x2a0] sm:$0xff]
    %v173 = vld [vmem:[#allocation5 + $0x2a8] sm:$0xff]
    %v174 = vld [vmem:[#allocation5 + $0x2b0] sm:$0xff]
    %v175 = vld [vmem:[#allocation5 + $0x2b8] sm:$0xff]
    %v176 = vld [vmem:[#allocation5 + $0x2c0] sm:$0xff]
    %v177 = vld [vmem:[#allocation5 + $0x2c8] sm:$0xff]
    %v178 = vld [vmem:[#allocation5 + $0x2d0] sm:$0xff]
    %v179 = vld [vmem:[#allocation5 + $0x2d8] sm:$0xff]
    %v180 = vld [vmem:[#allocation5 + $0x2e0] sm:$0xff]
    %v181 = vld [vmem:[#allocation5 + $0x2e8] sm:$0xff]
    %v182 = vld [vmem:[#allocation5 + $0x2f0] sm:$0xff]
    %v183 = vld [vmem:[#allocation5 + $0x2f8] sm:$0xff]
    %v184 = vld [vmem:[#allocation5 + $0x300] sm:$0xff]
    %v185 = vld [vmem:[#allocation5 + $0x308] sm:$0xff]
    %v186 = vld [vmem:[#allocation5 + $0x310] sm:$0xff]
    %v187 = vld [vmem:[#allocation5 + $0x318] sm:$0xff]
    %v188 = vld [vmem:[#allocation5 + $0x320] sm:$0xff]
    %v189 = vld [vmem:[#allocation5 + $0x328] sm:$0xff]
    %v190 = vld [vmem:[#allocation5 + $0x330] sm:$0xff]
    %v191 = vld [vmem:[#allocation5 + $0x338] sm:$0xff]
    %v192 = vld [vmem:[#allocation5 + $0x340] sm:$0xff]
    %v193 = vld [vmem:[#allocation5 + $0x348] sm:$0xff]
    %v194 = vld [vmem:[#allocation5 + $0x350] sm:$0xff]
    %v195 = vld [vmem:[#allocation5 + $0x358] sm:$0xff]
    %v196 = vld [vmem:[#allocation5 + $0x360] sm:$0xff]
    %v197 = vld [vmem:[#allocation5 + $0x368] sm:$0xff]
    %v198 = vld [vmem:[#allocation5 + $0x370] sm:$0xff]
    %v199 = vld [vmem:[#allocation5 + $0x378] sm:$0xff]
    %v200 = vld [vmem:[#allocation5 + $0x380] sm:$0xff]
    %v201 = vld [vmem:[#allocation5 + $0x388] sm:$0xff]
    %v202 = vld [vmem:[#allocation5 + $0x390] sm:$0xff]
    %v203 = vld [vmem:[#allocation5 + $0x398] sm:$0xff]
    %v204 = vld [vmem:[#allocation5 + $0x3a0] sm:$0xff]
    %v205 = vld [vmem:[#allocation5 + $0x3a8] sm:$0xff]
    %v206 = vld [vmem:[#allocation5 + $0x3b0] sm:$0xff]
    %v207 = vld [vmem:[#allocation5 + $0x3b8] sm:$0xff]
    %v208 = vld [vmem:[#allocation5 + $0x3c0] sm:$0xff]
    %v209 = vld [vmem:[#allocation5 + $0x3c8] sm:$0xff]
    %v210 = vld [vmem:[#allocation5 + $0x3d0] sm:$0xff]
    %v211 = vld [vmem:[#allocation5 + $0x3d8] sm:$0xff]
    %v212 = vld [vmem:[#allocation5 + $0x3e0] sm:$0xff]
    %v213 = vld [vmem:[#allocation5 + $0x3e8] sm:$0xff]
    %v214 = vld [vmem:[#allocation5 + $0x3f0] sm:$0xff]
    %v215 = vld [vmem:[#allocation5 + $0x3f8] sm:$0xff]
    %v216 = vld [vmem:[#allocation5 + $0x400] sm:$0xff]
    %v217 = vld [vmem:[#allocation5 + $0x408] sm:$0xff]
    %v218 = vld [vmem:[#allocation5 + $0x410] sm:$0xff]
    %v219 = vld [vmem:[#allocation5 + $0x418] sm:$0xff]
    %v220 = vld [vmem:[#allocation5 + $0x420] sm:$0xff]
    %v221 = vld [vmem:[#allocation5 + $0x428] sm:$0xff]
    %v222 = vld [vmem:[#allocation5 + $0x430] sm:$0xff]
    %v223 = vld [vmem:[#allocation5 + $0x438] sm:$0xff]
    %v224 = vld [vmem:[#allocation5 + $0x440] sm:$0xff]
    %v225 = vld [vmem:[#allocation5 + $0x448] sm:$0xff]
    %v226 = vld [vmem:[#allocation5 + $0x450] sm:$0xff]
    %v227 = vld [vmem:[#allocation5 + $0x458] sm:$0xff]
    %v228 = vld [vmem:[#allocation5 + $0x460] sm:$0xff]
    %v229 = vld [vmem:[#allocation5 + $0x468] sm:$0xff]
    %v230 = vld [vmem:[#allocation5 + $0x470] sm:$0xff]
    %v231 = vld [vmem:[#allocation5 + $0x478] sm:$0xff]
    %v232 = vld [vmem:[#allocation5 + $0x480] sm:$0xff]
    %v233 = vld [vmem:[#allocation5 + $0x488] sm:$0xff]
    %v234 = vld [vmem:[#allocation5 + $0x490] sm:$0xff]
    %v235 = vld [vmem:[#allocation5 + $0x498] sm:$0xff]
    %v236 = vld [vmem:[#allocation5 + $0x4a0] sm:$0xff]
    %v237 = vld [vmem:[#allocation5 + $0x4a8] sm:$0xff]
    %v238 = vld [vmem:[#allocation5 + $0x4b0] sm:$0xff]
    %v239 = vld [vmem:[#allocation5 + $0x4b8] sm:$0xff]
    %v240 = vld [vmem:[#allocation5 + $0x4c0] sm:$0xff]
    %v241 = vld [vmem:[#allocation5 + $0x4c8] sm:$0xff]
    %v242 = vld [vmem:[#allocation5 + $0x4d0] sm:$0xff]
    %v243 = vld [vmem:[#allocation5 + $0x4d8] sm:$0xff]
    %v244 = vld [vmem:[#allocation5 + $0x4e0] sm:$0xff]
    %v245 = vld [vmem:[#allocation5 + $0x4e8] sm:$0xff]
    %v246 = vld [vmem:[#allocation5 + $0x4f0] sm:$0xff]
    %v247 = vld [vmem:[#allocation5 + $0x4f8] sm:$0xff]
    %v248 = vld [vmem:[#allocation5 + $0x500] sm:$0xff]
    %v249 = vld [vmem:[#allocation5 + $0x508] sm:$0xff]
    %v250 = vld [vmem:[#allocation5 + $0x510] sm:$0xff]
    %v251 = vld [vmem:[#allocation5 + $0x518] sm:$0xff]
    %v252 = vld [vmem:[#allocation5 + $0x520] sm:$0xff]
    %v253 = vld [vmem:[#allocation5 + $0x528] sm:$0xff]
    %v254 = vld [vmem:[#allocation5 + $0x530] sm:$0xff]
    %v255 = vld [vmem:[#allocation5 + $0x538] sm:$0xff]
    %v256 = vld [vmem:[#allocation5 + $0x540] sm:$0xff]
    %v257 = vld [vmem:[#allocation5 + $0x548] sm:$0xff]
    %v258 = vld [vmem:[#allocation5 + $0x550] sm:$0xff]
    %v259 = vld [vmem:[#allocation5 + $0x558] sm:$0xff]
    %v260 = vld [vmem:[#allocation5 + $0x560] sm:$0xff]
    %v261 = vld [vmem:[#allocation5 + $0x568] sm:$0xff]
    %v262 = vld [vmem:[#allocation5 + $0x570] sm:$0xff]
    %v263 = vld [vmem:[#allocation5 + $0x578] sm:$0xff]
    %v264 = vld [vmem:[#allocation5 + $0x580] sm:$0xff]
    %v265 = vld [vmem:[#allocation5 + $0x588] sm:$0xff]
    %v266 = vld [vmem:[#allocation5 + $0x590] sm:$0xff]
    %v267 = vld [vmem:[#allocation5 + $0x598] sm:$0xff]
    %v268 = vld [vmem:[#allocation5 + $0x5a0] sm:$0xff]
    %v269 = vld [vmem:[#allocation5 + $0x5a8] sm:$0xff]
    %v270 = vld [vmem:[#allocation5 + $0x5b0] sm:$0xff]
    %v271 = vld [vmem:[#allocation5 + $0x5b8] sm:$0xff]
    %v272 = vld [vmem:[#allocation5 + $0x5c0] sm:$0xff]
    %v273 = vld [vmem:[#allocation5 + $0x5c8] sm:$0xff]
    %v274 = vld [vmem:[#allocation5 + $0x5d0] sm:$0xff]
    %v275 = vld [vmem:[#allocation5 + $0x5d8] sm:$0xff]
    %v276 = vld [vmem:[#allocation5 + $0x5e0] sm:$0xff]
    %v277 = vld [vmem:[#allocation5 + $0x5e8] sm:$0xff]
    %v278 = vld [vmem:[#allocation5 + $0x5f0] sm:$0xff]
    %v279 = vld [vmem:[#allocation5 + $0x5f8] sm:$0xff]
    %v280 = vld [vmem:[#allocation5 + $0x600] sm:$0xff]
    %v281 = vld [vmem:[#allocation5 + $0x608] sm:$0xff]
    %v282 = vld [vmem:[#allocation5 + $0x610] sm:$0xff]
    %v283 = vld [vmem:[#allocation5 + $0x618] sm:$0xff]
    %v284 = vld [vmem:[#allocation5 + $0x620] sm:$0xff]
    %v285 = vld [vmem:[#allocation5 + $0x628] sm:$0xff]
    %v286 = vld [vmem:[#allocation5 + $0x630] sm:$0xff]
    %v287 = vld [vmem:[#allocation5 + $0x638] sm:$0xff]
    %v288 = vld [vmem:[#allocation5 + $0x640] sm:$0xff]
    %v289 = vld [vmem:[#allocation5 + $0x648] sm:$0xff]
    %v290 = vld [vmem:[#allocation5 + $0x650] sm:$0xff]
    %v291 = vld [vmem:[#allocation5 + $0x658] sm:$0xff]
    %v292 = vld [vmem:[#allocation5 + $0x660] sm:$0xff]
    %v293 = vld [vmem:[#allocation5 + $0x668] sm:$0xff]
    %v294 = vld [vmem:[#allocation5 + $0x670] sm:$0xff]
    %v295 = vld [vmem:[#allocation5 + $0x678] sm:$0xff]
    %v296 = vld [vmem:[#allocation5 + $0x680] sm:$0xff]
    %v297 = vld [vmem:[#allocation5 + $0x688] sm:$0xff]
    %v298 = vld [vmem:[#allocation5 + $0x690] sm:$0xff]
    %v299 = vld [vmem:[#allocation5 + $0x698] sm:$0xff]
    %v300 = vld [vmem:[#allocation5 + $0x6a0] sm:$0xff]
    %v301 = vld [vmem:[#allocation5 + $0x6a8] sm:$0xff]
    %v302 = vld [vmem:[#allocation5 + $0x6b0] sm:$0xff]
    %v303 = vld [vmem:[#allocation5 + $0x6b8] sm:$0xff]
    %v304 = vld [vmem:[#allocation5 + $0x6c0] sm:$0xff]
    %v305 = vld [vmem:[#allocation5 + $0x6c8] sm:$0xff]
    %v306 = vld [vmem:[#allocation5 + $0x6d0] sm:$0xff]
    %v307 = vld [vmem:[#allocation5 + $0x6d8] sm:$0xff]
    %v308 = vld [vmem:[#allocation5 + $0x6e0] sm:$0xff]
    %v309 = vld [vmem:[#allocation5 + $0x6e8] sm:$0xff]
    %v310 = vld [vmem:[#allocation5 + $0x6f0] sm:$0xff]
    %v311 = vld [vmem:[#allocation5 + $0x6f8] sm:$0xff]
    %v312 = vld [vmem:[#allocation7] sm:$0xf]
    %v314 = vlaneseq
    %v315 = vshrl.u32 %v314, 7
    %v316 = vsub.s32 0, %v315
    %v317 = vrot.slane %v312, %v316
    %v318 = vlaneseq
    %v319 = vshrl.u32 %v318, 7
    %v320 = vsub.s32 1, %v319
    %v321 = vrot.slane %v312, %v320
    %v322 = vlaneseq
    %v323 = vshrl.u32 %v322, 7
    %v324 = vsub.s32 2, %v323
    %v325 = vrot.slane %v312, %v324
    %v326 = vlaneseq
    %v327 = vshrl.u32 %v326, 7
    %v328 = vsub.s32 3, %v327
    %v329 = vrot.slane %v312, %v328
    %v338 = vunpack.c.l.b16 %v84
    %v339 = vunpack.c.h.b16 %v84
    %v340 = vunpack.c.l.b16 %v85
    %v341 = vunpack.c.h.b16 %v85
    %v342 = vunpack.c.l.b16 %v86
    %v343 = vunpack.c.h.b16 %v86
    %v344 = vunpack.c.l.b16 %v87
    %v345 = vpack.c.b16 %v338, %v338
    %v346 = vpack.c.b16 %v339, %v339
    %v347 = vpack.c.b16 %v340, %v340
    %v348 = vpack.c.b16 %v341, %v341
    %v349 = vpack.c.b16 %v342, %v342
    %v350 = vpack.c.b16 %v343, %v343
    %v351 = vpack.c.b16 %v344, %v344
    %v583 = vunpack.c.l.b16 %v88
    %v584 = vunpack.c.h.b16 %v88
    %v585 = vunpack.c.l.b16 %v89
    %v586 = vunpack.c.h.b16 %v89
    %v587 = vunpack.c.l.b16 %v90
    %v588 = vunpack.c.h.b16 %v90
    %v589 = vunpack.c.l.b16 %v91
    %v590 = vunpack.c.h.b16 %v91
    %v591 = vunpack.c.l.b16 %v92
    %v592 = vunpack.c.h.b16 %v92
    %v593 = vunpack.c.l.b16 %v93
    %v594 = vunpack.c.h.b16 %v93
    %v595 = vunpack.c.l.b16 %v94
    %v596 = vunpack.c.h.b16 %v94
    %v597 = vunpack.c.l.b16 %v95
    %v598 = vunpack.c.h.b16 %v95
    %v599 = vunpack.c.l.b16 %v96
    %v600 = vunpack.c.h.b16 %v96
    %v601 = vunpack.c.l.b16 %v97
    %v602 = vunpack.c.h.b16 %v97
    %v603 = vunpack.c.l.b16 %v98
    %v604 = vunpack.c.h.b16 %v98
    %v605 = vunpack.c.l.b16 %v99
    %v606 = vunpack.c.h.b16 %v99
    %v607 = vunpack.c.l.b16 %v100
    %v608 = vunpack.c.h.b16 %v100
    %v609 = vunpack.c.l.b16 %v101
    %v610 = vunpack.c.h.b16 %v101
    %v611 = vunpack.c.l.b16 %v102
    %v612 = vunpack.c.h.b16 %v102
    %v613 = vunpack.c.l.b16 %v103
    %v614 = vunpack.c.h.b16 %v103
    %v615 = vunpack.c.l.b16 %v104
    %v616 = vunpack.c.h.b16 %v104
    %v617 = vunpack.c.l.b16 %v105
    %v618 = vunpack.c.h.b16 %v105
    %v619 = vunpack.c.l.b16 %v106
    %v620 = vunpack.c.h.b16 %v106
    %v621 = vunpack.c.l.b16 %v107
    %v622 = vunpack.c.h.b16 %v107
    %v623 = vunpack.c.l.b16 %v108
    %v624 = vunpack.c.h.b16 %v108
    %v625 = vunpack.c.l.b16 %v109
    %v626 = vunpack.c.h.b16 %v109
    %v627 = vunpack.c.l.b16 %v110
    %v628 = vunpack.c.h.b16 %v110
    %v629 = vunpack.c.l.b16 %v111
    %v630 = vunpack.c.h.b16 %v111
    %v631 = vunpack.c.l.b16 %v112
    %v632 = vunpack.c.h.b16 %v112
    %v633 = vunpack.c.l.b16 %v113
    %v634 = vunpack.c.h.b16 %v113
    %v635 = vunpack.c.l.b16 %v114
    %v636 = vunpack.c.h.b16 %v114
    %v637 = vunpack.c.l.b16 %v115
    %v638 = vunpack.c.h.b16 %v115
    %v639 = vunpack.c.l.b16 %v116
    %v640 = vunpack.c.h.b16 %v116
    %v641 = vunpack.c.l.b16 %v117
    %v642 = vunpack.c.h.b16 %v117
    %v643 = vunpack.c.l.b16 %v118
    %v644 = vunpack.c.h.b16 %v118
    %v645 = vunpack.c.l.b16 %v119
    %v646 = vunpack.c.h.b16 %v119
    %v647 = vunpack.c.l.b16 %v120
    %v648 = vunpack.c.h.b16 %v120
    %v649 = vunpack.c.l.b16 %v121
    %v650 = vunpack.c.h.b16 %v121
    %v651 = vunpack.c.l.b16 %v122
    %v652 = vunpack.c.h.b16 %v122
    %v653 = vunpack.c.l.b16 %v123
    %v654 = vunpack.c.h.b16 %v123
    %v655 = vunpack.c.l.b16 %v124
    %v656 = vunpack.c.h.b16 %v124
    %v657 = vunpack.c.l.b16 %v125
    %v658 = vunpack.c.h.b16 %v125
    %v659 = vunpack.c.l.b16 %v126
    %v660 = vunpack.c.h.b16 %v126
    %v661 = vunpack.c.l.b16 %v127
    %v662 = vunpack.c.h.b16 %v127
    %v663 = vunpack.c.l.b16 %v128
    %v664 = vunpack.c.h.b16 %v128
    %v665 = vunpack.c.l.b16 %v129
    %v666 = vunpack.c.h.b16 %v129
    %v667 = vunpack.c.l.b16 %v130
    %v668 = vunpack.c.h.b16 %v130
    %v669 = vunpack.c.l.b16 %v131
    %v670 = vunpack.c.h.b16 %v131
    %v671 = vunpack.c.l.b16 %v132
    %v672 = vunpack.c.h.b16 %v132
    %v673 = vunpack.c.l.b16 %v133
    %v674 = vunpack.c.h.b16 %v133
    %v675 = vunpack.c.l.b16 %v134
    %v676 = vunpack.c.h.b16 %v134
    %v677 = vunpack.c.l.b16 %v135
    %v678 = vunpack.c.h.b16 %v135
    %v679 = vunpack.c.l.b16 %v136
    %v680 = vunpack.c.h.b16 %v136
    %v681 = vunpack.c.l.b16 %v137
    %v682 = vunpack.c.h.b16 %v137
    %v683 = vunpack.c.l.b16 %v138
    %v684 = vunpack.c.h.b16 %v138
    %v685 = vunpack.c.l.b16 %v139
    %v686 = vunpack.c.h.b16 %v139
    %v687 = vunpack.c.l.b16 %v140
    %v688 = vunpack.c.h.b16 %v140
    %v689 = vunpack.c.l.b16 %v141
    %v690 = vunpack.c.h.b16 %v141
    %v691 = vunpack.c.l.b16 %v142
    %v692 = vunpack.c.h.b16 %v142
    %v693 = vunpack.c.l.b16 %v143
    %v694 = vunpack.c.h.b16 %v143
    %v695 = vunpack.c.l.b16 %v144
    %v696 = vunpack.c.h.b16 %v144
    %v697 = vunpack.c.l.b16 %v145
    %v698 = vunpack.c.h.b16 %v145
    %v699 = vunpack.c.l.b16 %v146
    %v700 = vunpack.c.h.b16 %v146
    %v701 = vunpack.c.l.b16 %v147
    %v702 = vunpack.c.h.b16 %v147
    %v703 = vunpack.c.l.b16 %v148
    %v704 = vunpack.c.h.b16 %v148
    %v705 = vunpack.c.l.b16 %v149
    %v706 = vunpack.c.h.b16 %v149
    %v707 = vunpack.c.l.b16 %v150
    %v708 = vunpack.c.h.b16 %v150
    %v709 = vunpack.c.l.b16 %v151
    %v710 = vunpack.c.h.b16 %v151
    %v711 = vunpack.c.l.b16 %v152
    %v712 = vunpack.c.h.b16 %v152
    %v713 = vunpack.c.l.b16 %v153
    %v714 = vunpack.c.h.b16 %v153
    %v715 = vunpack.c.l.b16 %v154
    %v716 = vunpack.c.h.b16 %v154
    %v717 = vunpack.c.l.b16 %v155
    %v718 = vunpack.c.h.b16 %v155
    %v719 = vunpack.c.l.b16 %v156
    %v720 = vunpack.c.h.b16 %v156
    %v721 = vunpack.c.l.b16 %v157
    %v722 = vunpack.c.h.b16 %v157
    %v723 = vunpack.c.l.b16 %v158
    %v724 = vunpack.c.h.b16 %v158
    %v725 = vunpack.c.l.b16 %v159
    %v726 = vunpack.c.h.b16 %v159
    %v727 = vunpack.c.l.b16 %v160
    %v728 = vunpack.c.h.b16 %v160
    %v729 = vunpack.c.l.b16 %v161
    %v730 = vunpack.c.h.b16 %v161
    %v731 = vunpack.c.l.b16 %v162
    %v732 = vunpack.c.h.b16 %v162
    %v733 = vunpack.c.l.b16 %v163
    %v734 = vunpack.c.h.b16 %v163
    %v735 = vunpack.c.l.b16 %v164
    %v736 = vunpack.c.h.b16 %v164
    %v737 = vunpack.c.l.b16 %v165
    %v738 = vunpack.c.h.b16 %v165
    %v739 = vunpack.c.l.b16 %v166
    %v740 = vunpack.c.h.b16 %v166
    %v741 = vunpack.c.l.b16 %v167
    %v742 = vunpack.c.h.b16 %v167
    %v743 = vunpack.c.l.b16 %v168
    %v744 = vunpack.c.h.b16 %v168
    %v745 = vunpack.c.l.b16 %v169
    %v746 = vunpack.c.h.b16 %v169
    %v747 = vunpack.c.l.b16 %v170
    %v748 = vunpack.c.h.b16 %v170
    %v749 = vunpack.c.l.b16 %v171
    %v750 = vunpack.c.h.b16 %v171
    %v751 = vunpack.c.l.b16 %v172
    %v752 = vunpack.c.h.b16 %v172
    %v753 = vunpack.c.l.b16 %v173
    %v754 = vunpack.c.h.b16 %v173
    %v755 = vunpack.c.l.b16 %v174
    %v756 = vunpack.c.h.b16 %v174
    %v757 = vunpack.c.l.b16 %v175
    %v758 = vunpack.c.h.b16 %v175
    %v759 = vunpack.c.l.b16 %v176
    %v760 = vunpack.c.h.b16 %v176
    %v761 = vunpack.c.l.b16 %v177
    %v762 = vunpack.c.h.b16 %v177
    %v763 = vunpack.c.l.b16 %v178
    %v764 = vunpack.c.h.b16 %v178
    %v765 = vunpack.c.l.b16 %v179
    %v766 = vunpack.c.h.b16 %v179
    %v767 = vunpack.c.l.b16 %v180
    %v768 = vunpack.c.h.b16 %v180
    %v769 = vunpack.c.l.b16 %v181
    %v770 = vunpack.c.h.b16 %v181
    %v771 = vunpack.c.l.b16 %v182
    %v772 = vunpack.c.h.b16 %v182
    %v773 = vunpack.c.l.b16 %v183
    %v774 = vunpack.c.h.b16 %v183
    %v775 = vunpack.c.l.b16 %v184
    %v776 = vunpack.c.h.b16 %v184
    %v777 = vunpack.c.l.b16 %v185
    %v778 = vunpack.c.h.b16 %v185
    %v779 = vunpack.c.l.b16 %v186
    %v780 = vunpack.c.h.b16 %v186
    %v781 = vunpack.c.l.b16 %v187
    %v782 = vunpack.c.h.b16 %v187
    %v783 = vunpack.c.l.b16 %v188
    %v784 = vunpack.c.h.b16 %v188
    %v785 = vunpack.c.l.b16 %v189
    %v786 = vunpack.c.h.b16 %v189
    %v787 = vunpack.c.l.b16 %v190
    %v788 = vunpack.c.h.b16 %v190
    %v789 = vunpack.c.l.b16 %v191
    %v790 = vunpack.c.h.b16 %v191
    %v791 = vunpack.c.l.b16 %v192
    %v792 = vunpack.c.h.b16 %v192
    %v793 = vunpack.c.l.b16 %v193
    %v794 = vunpack.c.h.b16 %v193
    %v795 = vunpack.c.l.b16 %v194
    %v796 = vunpack.c.h.b16 %v194
    %v797 = vunpack.c.l.b16 %v195
    %v798 = vunpack.c.h.b16 %v195
    %v799 = vunpack.c.l.b16 %v196
    %v800 = vunpack.c.h.b16 %v196
    %v801 = vunpack.c.l.b16 %v197
    %v802 = vunpack.c.h.b16 %v197
    %v803 = vunpack.c.l.b16 %v198
    %v804 = vunpack.c.h.b16 %v198
    %v805 = vunpack.c.l.b16 %v199
    %v806 = vunpack.c.h.b16 %v199
    %v807 = vunpack.c.l.b16 %v200
    %v808 = vunpack.c.h.b16 %v200
    %v809 = vunpack.c.l.b16 %v201
    %v810 = vunpack.c.h.b16 %v201
    %v811 = vunpack.c.l.b16 %v202
    %v812 = vunpack.c.h.b16 %v202
    %v813 = vunpack.c.l.b16 %v203
    %v814 = vunpack.c.h.b16 %v203
    %v815 = vunpack.c.l.b16 %v204
    %v816 = vunpack.c.h.b16 %v204
    %v817 = vunpack.c.l.b16 %v205
    %v818 = vunpack.c.h.b16 %v205
    %v819 = vunpack.c.l.b16 %v206
    %v820 = vunpack.c.h.b16 %v206
    %v821 = vunpack.c.l.b16 %v207
    %v822 = vunpack.c.h.b16 %v207
    %v823 = vunpack.c.l.b16 %v208
    %v824 = vunpack.c.h.b16 %v208
    %v825 = vunpack.c.l.b16 %v209
    %v826 = vunpack.c.h.b16 %v209
    %v827 = vunpack.c.l.b16 %v210
    %v828 = vunpack.c.h.b16 %v210
    %v829 = vunpack.c.l.b16 %v211
    %v830 = vunpack.c.h.b16 %v211
    %v831 = vunpack.c.l.b16 %v212
    %v832 = vunpack.c.h.b16 %v212
    %v833 = vunpack.c.l.b16 %v213
    %v834 = vunpack.c.h.b16 %v213
    %v835 = vunpack.c.l.b16 %v214
    %v836 = vunpack.c.h.b16 %v214
    %v837 = vunpack.c.l.b16 %v215
    %v838 = vunpack.c.h.b16 %v215
    %v839 = vunpack.c.l.b16 %v216
    %v840 = vunpack.c.h.b16 %v216
    %v841 = vunpack.c.l.b16 %v217
    %v842 = vunpack.c.h.b16 %v217
    %v843 = vunpack.c.l.b16 %v218
    %v844 = vunpack.c.h.b16 %v218
    %v845 = vunpack.c.l.b16 %v219
    %v846 = vunpack.c.h.b16 %v219
    %v847 = vunpack.c.l.b16 %v220
    %v848 = vunpack.c.h.b16 %v220
    %v849 = vunpack.c.l.b16 %v221
    %v850 = vunpack.c.h.b16 %v221
    %v851 = vunpack.c.l.b16 %v222
    %v852 = vunpack.c.h.b16 %v222
    %v853 = vunpack.c.l.b16 %v223
    %v854 = vunpack.c.h.b16 %v223
    %v855 = vunpack.c.l.b16 %v224
    %v856 = vunpack.c.h.b16 %v224
    %v857 = vunpack.c.l.b16 %v225
    %v858 = vunpack.c.h.b16 %v225
    %v859 = vunpack.c.l.b16 %v226
    %v860 = vunpack.c.h.b16 %v226
    %v861 = vunpack.c.l.b16 %v227
    %v862 = vunpack.c.h.b16 %v227
    %v863 = vunpack.c.l.b16 %v228
    %v864 = vunpack.c.h.b16 %v228
    %v865 = vunpack.c.l.b16 %v229
    %v866 = vunpack.c.h.b16 %v229
    %v867 = vunpack.c.l.b16 %v230
    %v868 = vunpack.c.h.b16 %v230
    %v869 = vunpack.c.l.b16 %v231
    %v870 = vunpack.c.h.b16 %v231
    %v871 = vunpack.c.l.b16 %v232
    %v872 = vunpack.c.h.b16 %v232
    %v873 = vunpack.c.l.b16 %v233
    %v874 = vunpack.c.h.b16 %v233
    %v875 = vunpack.c.l.b16 %v234
    %v876 = vunpack.c.h.b16 %v234
    %v877 = vunpack.c.l.b16 %v235
    %v878 = vunpack.c.h.b16 %v235
    %v879 = vunpack.c.l.b16 %v236
    %v880 = vunpack.c.h.b16 %v236
    %v881 = vunpack.c.l.b16 %v237
    %v882 = vunpack.c.h.b16 %v237
    %v883 = vunpack.c.l.b16 %v238
    %v884 = vunpack.c.h.b16 %v238
    %v885 = vunpack.c.l.b16 %v239
    %v886 = vunpack.c.h.b16 %v239
    %v887 = vunpack.c.l.b16 %v240
    %v888 = vunpack.c.h.b16 %v240
    %v889 = vunpack.c.l.b16 %v241
    %v890 = vunpack.c.h.b16 %v241
    %v891 = vunpack.c.l.b16 %v242
    %v892 = vunpack.c.h.b16 %v242
    %v893 = vunpack.c.l.b16 %v243
    %v894 = vunpack.c.h.b16 %v243
    %v895 = vunpack.c.l.b16 %v244
    %v896 = vunpack.c.h.b16 %v244
    %v897 = vunpack.c.l.b16 %v245
    %v898 = vunpack.c.h.b16 %v245
    %v899 = vunpack.c.l.b16 %v246
    %v900 = vunpack.c.h.b16 %v246
    %v901 = vunpack.c.l.b16 %v247
    %v902 = vunpack.c.h.b16 %v247
    %v903 = vunpack.c.l.b16 %v248
    %v904 = vunpack.c.h.b16 %v248
    %v905 = vunpack.c.l.b16 %v249
    %v906 = vunpack.c.h.b16 %v249
    %v907 = vunpack.c.l.b16 %v250
    %v908 = vunpack.c.h.b16 %v250
    %v909 = vunpack.c.l.b16 %v251
    %v910 = vunpack.c.h.b16 %v251
    %v911 = vunpack.c.l.b16 %v252
    %v912 = vunpack.c.h.b16 %v252
    %v913 = vunpack.c.l.b16 %v253
    %v914 = vunpack.c.h.b16 %v253
    %v915 = vunpack.c.l.b16 %v254
    %v916 = vunpack.c.h.b16 %v254
    %v917 = vunpack.c.l.b16 %v255
    %v918 = vunpack.c.h.b16 %v255
    %v919 = vunpack.c.l.b16 %v256
    %v920 = vunpack.c.h.b16 %v256
    %v921 = vunpack.c.l.b16 %v257
    %v922 = vunpack.c.h.b16 %v257
    %v923 = vunpack.c.l.b16 %v258
    %v924 = vunpack.c.h.b16 %v258
    %v925 = vunpack.c.l.b16 %v259
    %v926 = vunpack.c.h.b16 %v259
    %v927 = vunpack.c.l.b16 %v260
    %v928 = vunpack.c.h.b16 %v260
    %v929 = vunpack.c.l.b16 %v261
    %v930 = vunpack.c.h.b16 %v261
    %v931 = vunpack.c.l.b16 %v262
    %v932 = vunpack.c.h.b16 %v262
    %v933 = vunpack.c.l.b16 %v263
    %v934 = vunpack.c.h.b16 %v263
    %v935 = vunpack.c.l.b16 %v264
    %v936 = vunpack.c.h.b16 %v264
    %v937 = vunpack.c.l.b16 %v265
    %v938 = vunpack.c.h.b16 %v265
    %v939 = vunpack.c.l.b16 %v266
    %v940 = vunpack.c.h.b16 %v266
    %v941 = vunpack.c.l.b16 %v267
    %v942 = vunpack.c.h.b16 %v267
    %v943 = vunpack.c.l.b16 %v268
    %v944 = vunpack.c.h.b16 %v268
    %v945 = vunpack.c.l.b16 %v269
    %v946 = vunpack.c.h.b16 %v269
    %v947 = vunpack.c.l.b16 %v270
    %v948 = vunpack.c.h.b16 %v270
    %v949 = vunpack.c.l.b16 %v271
    %v950 = vunpack.c.h.b16 %v271
    %v951 = vunpack.c.l.b16 %v272
    %v952 = vunpack.c.h.b16 %v272
    %v953 = vunpack.c.l.b16 %v273
    %v954 = vunpack.c.h.b16 %v273
    %v955 = vunpack.c.l.b16 %v274
    %v956 = vunpack.c.h.b16 %v274
    %v957 = vunpack.c.l.b16 %v275
    %v958 = vunpack.c.h.b16 %v275
    %v959 = vunpack.c.l.b16 %v276
    %v960 = vunpack.c.h.b16 %v276
    %v961 = vunpack.c.l.b16 %v277
    %v962 = vunpack.c.h.b16 %v277
    %v963 = vunpack.c.l.b16 %v278
    %v964 = vunpack.c.h.b16 %v278
    %v965 = vunpack.c.l.b16 %v279
    %v966 = vunpack.c.h.b16 %v279
    %v967 = vunpack.c.l.b16 %v280
    %v968 = vunpack.c.h.b16 %v280
    %v969 = vunpack.c.l.b16 %v281
    %v970 = vunpack.c.h.b16 %v281
    %v971 = vunpack.c.l.b16 %v282
    %v972 = vunpack.c.h.b16 %v282
    %v973 = vunpack.c.l.b16 %v283
    %v974 = vunpack.c.h.b16 %v283
    %v975 = vunpack.c.l.b16 %v284
    %v976 = vunpack.c.h.b16 %v284
    %v977 = vunpack.c.l.b16 %v285
    %v978 = vunpack.c.h.b16 %v285
    %v979 = vunpack.c.l.b16 %v286
    %v980 = vunpack.c.h.b16 %v286
    %v981 = vunpack.c.l.b16 %v287
    %v982 = vunpack.c.h.b16 %v287
    %v983 = vunpack.c.l.b16 %v288
    %v984 = vunpack.c.h.b16 %v288
    %v985 = vunpack.c.l.b16 %v289
    %v986 = vunpack.c.h.b16 %v289
    %v987 = vunpack.c.l.b16 %v290
    %v988 = vunpack.c.h.b16 %v290
    %v989 = vunpack.c.l.b16 %v291
    %v990 = vunpack.c.h.b16 %v291
    %v991 = vunpack.c.l.b16 %v292
    %v992 = vunpack.c.h.b16 %v292
    %v993 = vunpack.c.l.b16 %v293
    %v994 = vunpack.c.h.b16 %v293
    %v995 = vunpack.c.l.b16 %v294
    %v996 = vunpack.c.h.b16 %v294
    %v997 = vunpack.c.l.b16 %v295
    %v998 = vunpack.c.h.b16 %v295
    %v999 = vunpack.c.l.b16 %v296
    %v1000 = vunpack.c.h.b16 %v296
    %v1001 = vunpack.c.l.b16 %v297
    %v1002 = vunpack.c.h.b16 %v297
    %v1003 = vunpack.c.l.b16 %v298
    %v1004 = vunpack.c.h.b16 %v298
    %v1005 = vunpack.c.l.b16 %v299
    %v1006 = vunpack.c.h.b16 %v299
    %v1007 = vunpack.c.l.b16 %v300
    %v1008 = vunpack.c.h.b16 %v300
    %v1009 = vunpack.c.l.b16 %v301
    %v1010 = vunpack.c.h.b16 %v301
    %v1011 = vunpack.c.l.b16 %v302
    %v1012 = vunpack.c.h.b16 %v302
    %v1013 = vunpack.c.l.b16 %v303
    %v1014 = vunpack.c.h.b16 %v303
    %v1015 = vunpack.c.l.b16 %v304
    %v1016 = vunpack.c.h.b16 %v304
    %v1017 = vunpack.c.l.b16 %v305
    %v1018 = vunpack.c.h.b16 %v305
    %v1019 = vunpack.c.l.b16 %v306
    %v1020 = vunpack.c.h.b16 %v306
    %v1021 = vunpack.c.l.b16 %v307
    %v1022 = vunpack.c.h.b16 %v307
    %v1023 = vunpack.c.l.b16 %v308
    %v1024 = vunpack.c.h.b16 %v308
    %v1025 = vunpack.c.l.b16 %v309
    %v1026 = vunpack.c.h.b16 %v309
    %v1027 = vunpack.c.l.b16 %v310
    %v1028 = vunpack.c.h.b16 %v310
    %v1029 = vunpack.c.l.b16 %v311
    %v1030 = vunpack.c.h.b16 %v311
    %v1031 = vpack.c.b16 %v587, %v583
    %v1032 = vpack.c.b16 %v588, %v584
    %v1033 = vpack.c.b16 %v589, %v585
    %v1034 = vpack.c.b16 %v590, %v586
    %v1035 = vpack.c.b16 %v595, %v591
    %v1036 = vpack.c.b16 %v596, %v592
    %v1037 = vpack.c.b16 %v597, %v593
    %v1038 = vpack.c.b16 %v598, %v594
    %v1039 = vpack.c.b16 %v603, %v599
    %v1040 = vpack.c.b16 %v604, %v600
    %v1041 = vpack.c.b16 %v605, %v601
    %v1042 = vpack.c.b16 %v606, %v602
    %v1043 = vpack.c.b16 %v611, %v607
    %v1044 = vpack.c.b16 %v612, %v608
    %v1045 = vpack.c.b16 %v613, %v609
    %v1046 = vpack.c.b16 %v614, %v610
    %v1047 = vpack.c.b16 %v619, %v615
    %v1048 = vpack.c.b16 %v620, %v616
    %v1049 = vpack.c.b16 %v621, %v617
    %v1050 = vpack.c.b16 %v622, %v618
    %v1051 = vpack.c.b16 %v627, %v623
    %v1052 = vpack.c.b16 %v628, %v624
    %v1053 = vpack.c.b16 %v629, %v625
    %v1054 = vpack.c.b16 %v630, %v626
    %v1055 = vpack.c.b16 %v635, %v631
    %v1056 = vpack.c.b16 %v636, %v632
    %v1057 = vpack.c.b16 %v637, %v633
    %v1058 = vpack.c.b16 %v638, %v634
    %v1059 = vpack.c.b16 %v643, %v639
    %v1060 = vpack.c.b16 %v644, %v640
    %v1061 = vpack.c.b16 %v645, %v641
    %v1062 = vpack.c.b16 %v646, %v642
    %v1063 = vpack.c.b16 %v651, %v647
    %v1064 = vpack.c.b16 %v652, %v648
    %v1065 = vpack.c.b16 %v653, %v649
    %v1066 = vpack.c.b16 %v654, %v650
    %v1067 = vpack.c.b16 %v659, %v655
    %v1068 = vpack.c.b16 %v660, %v656
    %v1069 = vpack.c.b16 %v661, %v657
    %v1070 = vpack.c.b16 %v662, %v658
    %v1071 = vpack.c.b16 %v667, %v663
    %v1072 = vpack.c.b16 %v668, %v664
    %v1073 = vpack.c.b16 %v669, %v665
    %v1074 = vpack.c.b16 %v670, %v666
    %v1075 = vpack.c.b16 %v675, %v671
    %v1076 = vpack.c.b16 %v676, %v672
    %v1077 = vpack.c.b16 %v677, %v673
    %v1078 = vpack.c.b16 %v678, %v674
    %v1079 = vpack.c.b16 %v683, %v679
    %v1080 = vpack.c.b16 %v684, %v680
    %v1081 = vpack.c.b16 %v685, %v681
    %v1082 = vpack.c.b16 %v686, %v682
    %v1083 = vpack.c.b16 %v691, %v687
    %v1084 = vpack.c.b16 %v692, %v688
    %v1085 = vpack.c.b16 %v693, %v689
    %v1086 = vpack.c.b16 %v694, %v690
    %v1087 = vpack.c.b16 %v699, %v695
    %v1088 = vpack.c.b16 %v700, %v696
    %v1089 = vpack.c.b16 %v701, %v697
    %v1090 = vpack.c.b16 %v702, %v698
    %v1091 = vpack.c.b16 %v707, %v703
    %v1092 = vpack.c.b16 %v708, %v704
    %v1093 = vpack.c.b16 %v709, %v705
    %v1094 = vpack.c.b16 %v710, %v706
    %v1095 = vpack.c.b16 %v715, %v711
    %v1096 = vpack.c.b16 %v716, %v712
    %v1097 = vpack.c.b16 %v717, %v713
    %v1098 = vpack.c.b16 %v718, %v714
    %v1099 = vpack.c.b16 %v723, %v719
    %v1100 = vpack.c.b16 %v724, %v720
    %v1101 = vpack.c.b16 %v725, %v721
    %v1102 = vpack.c.b16 %v726, %v722
    %v1103 = vpack.c.b16 %v731, %v727
    %v1104 = vpack.c.b16 %v732, %v728
    %v1105 = vpack.c.b16 %v733, %v729
    %v1106 = vpack.c.b16 %v734, %v730
    %v1107 = vpack.c.b16 %v739, %v735
    %v1108 = vpack.c.b16 %v740, %v736
    %v1109 = vpack.c.b16 %v741, %v737
    %v1110 = vpack.c.b16 %v742, %v738
    %v1111 = vpack.c.b16 %v747, %v743
    %v1112 = vpack.c.b16 %v748, %v744
    %v1113 = vpack.c.b16 %v749, %v745
    %v1114 = vpack.c.b16 %v750, %v746
    %v1115 = vpack.c.b16 %v755, %v751
    %v1116 = vpack.c.b16 %v756, %v752
    %v1117 = vpack.c.b16 %v757, %v753
    %v1118 = vpack.c.b16 %v758, %v754
    %v1119 = vpack.c.b16 %v763, %v759
    %v1120 = vpack.c.b16 %v764, %v760
    %v1121 = vpack.c.b16 %v765, %v761
    %v1122 = vpack.c.b16 %v766, %v762
    %v1123 = vpack.c.b16 %v771, %v767
    %v1124 = vpack.c.b16 %v772, %v768
    %v1125 = vpack.c.b16 %v773, %v769
    %v1126 = vpack.c.b16 %v774, %v770
    %v1127 = vpack.c.b16 %v779, %v775
    %v1128 = vpack.c.b16 %v780, %v776
    %v1129 = vpack.c.b16 %v781, %v777
    %v1130 = vpack.c.b16 %v782, %v778
    %v1131 = vpack.c.b16 %v787, %v783
    %v1132 = vpack.c.b16 %v788, %v784
    %v1133 = vpack.c.b16 %v789, %v785
    %v1134 = vpack.c.b16 %v790, %v786
    %v1135 = vpack.c.b16 %v795, %v791
    %v1136 = vpack.c.b16 %v796, %v792
    %v1137 = vpack.c.b16 %v797, %v793
    %v1138 = vpack.c.b16 %v798, %v794
    %v1139 = vpack.c.b16 %v803, %v799
    %v1140 = vpack.c.b16 %v804, %v800
    %v1141 = vpack.c.b16 %v805, %v801
    %v1142 = vpack.c.b16 %v806, %v802
    %v1143 = vpack.c.b16 %v811, %v807
    %v1144 = vpack.c.b16 %v812, %v808
    %v1145 = vpack.c.b16 %v813, %v809
    %v1146 = vpack.c.b16 %v814, %v810
    %v1147 = vpack.c.b16 %v819, %v815
    %v1148 = vpack.c.b16 %v820, %v816
    %v1149 = vpack.c.b16 %v821, %v817
    %v1150 = vpack.c.b16 %v822, %v818
    %v1151 = vpack.c.b16 %v827, %v823
    %v1152 = vpack.c.b16 %v828, %v824
    %v1153 = vpack.c.b16 %v829, %v825
    %v1154 = vpack.c.b16 %v830, %v826
    %v1155 = vpack.c.b16 %v835, %v831
    %v1156 = vpack.c.b16 %v836, %v832
    %v1157 = vpack.c.b16 %v837, %v833
    %v1158 = vpack.c.b16 %v838, %v834
    %v1159 = vpack.c.b16 %v843, %v839
    %v1160 = vpack.c.b16 %v844, %v840
    %v1161 = vpack.c.b16 %v845, %v841
    %v1162 = vpack.c.b16 %v846, %v842
    %v1163 = vpack.c.b16 %v851, %v847
    %v1164 = vpack.c.b16 %v852, %v848
    %v1165 = vpack.c.b16 %v853, %v849
    %v1166 = vpack.c.b16 %v854, %v850
    %v1167 = vpack.c.b16 %v859, %v855
    %v1168 = vpack.c.b16 %v860, %v856
    %v1169 = vpack.c.b16 %v861, %v857
    %v1170 = vpack.c.b16 %v862, %v858
    %v1171 = vpack.c.b16 %v867, %v863
    %v1172 = vpack.c.b16 %v868, %v864
    %v1173 = vpack.c.b16 %v869, %v865
    %v1174 = vpack.c.b16 %v870, %v866
    %v1175 = vpack.c.b16 %v875, %v871
    %v1176 = vpack.c.b16 %v876, %v872
    %v1177 = vpack.c.b16 %v877, %v873
    %v1178 = vpack.c.b16 %v878, %v874
    %v1179 = vpack.c.b16 %v883, %v879
    %v1180 = vpack.c.b16 %v884, %v880
    %v1181 = vpack.c.b16 %v885, %v881
    %v1182 = vpack.c.b16 %v886, %v882
    %v1183 = vpack.c.b16 %v891, %v887
    %v1184 = vpack.c.b16 %v892, %v888
    %v1185 = vpack.c.b16 %v893, %v889
    %v1186 = vpack.c.b16 %v894, %v890
    %v1187 = vpack.c.b16 %v899, %v895
    %v1188 = vpack.c.b16 %v900, %v896
    %v1189 = vpack.c.b16 %v901, %v897
    %v1190 = vpack.c.b16 %v902, %v898
    %v1191 = vpack.c.b16 %v907, %v903
    %v1192 = vpack.c.b16 %v908, %v904
    %v1193 = vpack.c.b16 %v909, %v905
    %v1194 = vpack.c.b16 %v910, %v906
    %v1195 = vpack.c.b16 %v915, %v911
    %v1196 = vpack.c.b16 %v916, %v912
    %v1197 = vpack.c.b16 %v917, %v913
    %v1198 = vpack.c.b16 %v918, %v914
    %v1199 = vpack.c.b16 %v923, %v919
    %v1200 = vpack.c.b16 %v924, %v920
    %v1201 = vpack.c.b16 %v925, %v921
    %v1202 = vpack.c.b16 %v926, %v922
    %v1203 = vpack.c.b16 %v931, %v927
    %v1204 = vpack.c.b16 %v932, %v928
    %v1205 = vpack.c.b16 %v933, %v929
    %v1206 = vpack.c.b16 %v934, %v930
    %v1207 = vpack.c.b16 %v939, %v935
    %v1208 = vpack.c.b16 %v940, %v936
    %v1209 = vpack.c.b16 %v941, %v937
    %v1210 = vpack.c.b16 %v942, %v938
    %v1211 = vpack.c.b16 %v947, %v943
    %v1212 = vpack.c.b16 %v948, %v944
    %v1213 = vpack.c.b16 %v949, %v945
    %v1214 = vpack.c.b16 %v950, %v946
    %v1215 = vpack.c.b16 %v955, %v951
    %v1216 = vpack.c.b16 %v956, %v952
    %v1217 = vpack.c.b16 %v957, %v953
    %v1218 = vpack.c.b16 %v958, %v954
    %v1219 = vpack.c.b16 %v963, %v959
    %v1220 = vpack.c.b16 %v964, %v960
    %v1221 = vpack.c.b16 %v965, %v961
    %v1222 = vpack.c.b16 %v966, %v962
    %v1223 = vpack.c.b16 %v971, %v967
    %v1224 = vpack.c.b16 %v972, %v968
    %v1225 = vpack.c.b16 %v973, %v969
    %v1226 = vpack.c.b16 %v974, %v970
    %v1227 = vpack.c.b16 %v979, %v975
    %v1228 = vpack.c.b16 %v980, %v976
    %v1229 = vpack.c.b16 %v981, %v977
    %v1230 = vpack.c.b16 %v982, %v978
    %v1231 = vpack.c.b16 %v987, %v983
    %v1232 = vpack.c.b16 %v988, %v984
    %v1233 = vpack.c.b16 %v989, %v985
    %v1234 = vpack.c.b16 %v990, %v986
    %v1235 = vpack.c.b16 %v995, %v991
    %v1236 = vpack.c.b16 %v996, %v992
    %v1237 = vpack.c.b16 %v997, %v993
    %v1238 = vpack.c.b16 %v998, %v994
    %v1239 = vpack.c.b16 %v1003, %v999
    %v1240 = vpack.c.b16 %v1004, %v1000
    %v1241 = vpack.c.b16 %v1005, %v1001
    %v1242 = vpack.c.b16 %v1006, %v1002
    %v1243 = vpack.c.b16 %v1011, %v1007
    %v1244 = vpack.c.b16 %v1012, %v1008
    %v1245 = vpack.c.b16 %v1013, %v1009
    %v1246 = vpack.c.b16 %v1014, %v1010
    %v1247 = vpack.c.b16 %v1019, %v1015
    %v1248 = vpack.c.b16 %v1020, %v1016
    %v1249 = vpack.c.b16 %v1021, %v1017
    %v1250 = vpack.c.b16 %v1022, %v1018
    %v1251 = vpack.c.b16 %v1027, %v1023
    %v1252 = vpack.c.b16 %v1028, %v1024
    %v1253 = vpack.c.b16 %v1029, %v1025
    %v1254 = vpack.c.b16 %v1030, %v1026
    %1479 = vmatprep.subr.bf16.mxu0 %v1032
    %1480 = vmatpush1.bf16.msra.mxu0 %v1031
    %1481 = vmatprep.subr.bf16.mxu0 %v1036
    %1482 = vmatpush1.bf16.msra.mxu0 %v1035
    %1483 = vmatprep.subr.bf16.mxu0 %v1040
    %1484 = vmatpush1.bf16.msra.mxu0 %v1039
    %1485 = vmatprep.subr.bf16.mxu0 %v1044
    %1486 = vmatpush1.bf16.msra.mxu0 %v1043
    %1487 = vmatprep.subr.bf16.mxu0 %v1048
    %1488 = vmatpush1.bf16.msra.mxu0 %v1047
    %1489 = vmatprep.subr.bf16.mxu0 %v1052
    %1490 = vmatpush1.bf16.msra.mxu0 %v1051
    %1491 = vmatprep.subr.bf16.mxu0 %v1056
    %1492 = vmatpush1.bf16.msra.mxu0 %v1055
    %1493 = vmatprep.subr.bf16.mxu0 %v1060
    %1494 = vmatpush1.bf16.msra.mxu0 %v1059
    %1495 = vmatprep.subr.bf16.mxu0 %v1064
    %1496 = vmatpush1.bf16.msra.mxu0 %v1063
    %1497 = vmatprep.subr.bf16.mxu0 %v1068
    %1498 = vmatpush1.bf16.msra.mxu0 %v1067
    %1499 = vmatprep.subr.bf16.mxu0 %v1072
    %1500 = vmatpush1.bf16.msra.mxu0 %v1071
    %1501 = vmatprep.subr.bf16.mxu0 %v1076
    %1502 = vmatpush1.bf16.msra.mxu0 %v1075
    %1503 = vmatprep.subr.bf16.mxu0 %v1080
    %1504 = vmatpush1.bf16.msra.mxu0 %v1079
    %1505 = vmatprep.subr.bf16.mxu0 %v1084
    %1506 = vmatpush1.bf16.msra.mxu0 %v1083
    %1507 = vmatprep.subr.bf16.mxu0 %v1088
    %1508 = vmatpush1.bf16.msra.mxu0 %v1087
    %1509 = vmatprep.subr.bf16.mxu0 %v1092
    %1510 = vmatpush1.bf16.msra.mxu0 %v1091
    %1511 = vmatprep.mubr.bf16.mxu0 %v346
    %1512 = vmatmul.mubr.bf16.gmra.mrb[0].mxu0 %v345
    %v1513 = vpop.f32.mrb[0].mxu0
    %v1514 = vadd.f32 %v317, %v1513
    %v1515 = vpop.f32.mrb[0].mxu0
    %v1516 = vadd.f32 %v321, %v1515
    %v1517 = vpop.f32.mrb[0].mxu0
    %v1518 = vpop.f32.mrb[0].mxu0
    %1519 = vdwg.mxu0
    %1520 = vmatprep.subr.bf16.mxu0 %v1096
    %1521 = vmatpush1.bf16.msra.mxu0 %v1095
    %1522 = vmatprep.subr.bf16.mxu0 %v1100
    %1523 = vmatpush1.bf16.msra.mxu0 %v1099
    %1524 = vmatprep.subr.bf16.mxu0 %v1104
    %1525 = vmatpush1.bf16.msra.mxu0 %v1103
    %1526 = vmatprep.subr.bf16.mxu0 %v1108
    %1527 = vmatpush1.bf16.msra.mxu0 %v1107
    %1528 = vmatprep.subr.bf16.mxu0 %v1112
    %1529 = vmatpush1.bf16.msra.mxu0 %v1111
    %1530 = vmatprep.subr.bf16.mxu0 %v1116
    %1531 = vmatpush1.bf16.msra.mxu0 %v1115
    %1532 = vmatprep.subr.bf16.mxu0 %v1120
    %1533 = vmatpush1.bf16.msra.mxu0 %v1119
    %1534 = vmatprep.subr.bf16.mxu0 %v1124
    %1535 = vmatpush1.bf16.msra.mxu0 %v1123
    %1536 = vmatprep.subr.bf16.mxu0 %v1128
    %1537 = vmatpush1.bf16.msra.mxu0 %v1127
    %1538 = vmatprep.subr.bf16.mxu0 %v1132
    %1539 = vmatpush1.bf16.msra.mxu0 %v1131
    %1540 = vmatprep.subr.bf16.mxu0 %v1136
    %1541 = vmatpush1.bf16.msra.mxu0 %v1135
    %1542 = vmatprep.subr.bf16.mxu0 %v1140
    %1543 = vmatpush1.bf16.msra.mxu0 %v1139
    %1544 = vmatprep.subr.bf16.mxu0 %v1144
    %1545 = vmatpush1.bf16.msra.mxu0 %v1143
    %1546 = vmatprep.subr.bf16.mxu0 %v1148
    %1547 = vmatpush1.bf16.msra.mxu0 %v1147
    %1548 = vmatprep.subr.bf16.mxu0 %v1152
    %1549 = vmatpush1.bf16.msra.mxu0 %v1151
    %1550 = vmatprep.subr.bf16.mxu0 %v1156
    %1551 = vmatpush1.bf16.msra.mxu0 %v1155
    %1552 = vmatprep.mubr.bf16.mxu0 %v348
    %1553 = vmatmul.mubr.bf16.gmra.mrb[0].mxu0 %v347
    %v1554 = vpop.f32.mrb[0].mxu0
    %v1555 = vadd.f32 %v1514, %v1554
    %v1556 = vpop.f32.mrb[0].mxu0
    %v1557 = vadd.f32 %v1516, %v1556
    %v1558 = vpop.f32.mrb[0].mxu0
    %v1559 = vpop.f32.mrb[0].mxu0
    %1560 = vdwg.mxu0
    %1561 = vmatprep.subr.bf16.mxu0 %v1160
    %1562 = vmatpush1.bf16.msra.mxu0 %v1159
    %1563 = vmatprep.subr.bf16.mxu0 %v1164
    %1564 = vmatpush1.bf16.msra.mxu0 %v1163
    %1565 = vmatprep.subr.bf16.mxu0 %v1168
    %1566 = vmatpush1.bf16.msra.mxu0 %v1167
    %1567 = vmatprep.subr.bf16.mxu0 %v1172
    %1568 = vmatpush1.bf16.msra.mxu0 %v1171
    %1569 = vmatprep.subr.bf16.mxu0 %v1176
    %1570 = vmatpush1.bf16.msra.mxu0 %v1175
    %1571 = vmatprep.subr.bf16.mxu0 %v1180
    %1572 = vmatpush1.bf16.msra.mxu0 %v1179
    %1573 = vmatprep.subr.bf16.mxu0 %v1184
    %1574 = vmatpush1.bf16.msra.mxu0 %v1183
    %1575 = vmatprep.subr.bf16.mxu0 %v1188
    %1576 = vmatpush1.bf16.msra.mxu0 %v1187
    %1577 = vmatprep.subr.bf16.mxu0 %v1192
    %1578 = vmatpush1.bf16.msra.mxu0 %v1191
    %1579 = vmatprep.subr.bf16.mxu0 %v1196
    %1580 = vmatpush1.bf16.msra.mxu0 %v1195
    %1581 = vmatprep.subr.bf16.mxu0 %v1200
    %1582 = vmatpush1.bf16.msra.mxu0 %v1199
    %1583 = vmatprep.subr.bf16.mxu0 %v1204
    %1584 = vmatpush1.bf16.msra.mxu0 %v1203
    %1585 = vmatprep.subr.bf16.mxu0 %v1208
    %1586 = vmatpush1.bf16.msra.mxu0 %v1207
    %1587 = vmatprep.subr.bf16.mxu0 %v1212
    %1588 = vmatpush1.bf16.msra.mxu0 %v1211
    %1589 = vmatprep.subr.bf16.mxu0 %v1216
    %1590 = vmatpush1.bf16.msra.mxu0 %v1215
    %1591 = vmatprep.subr.bf16.mxu0 %v1220
    %1592 = vmatpush1.bf16.msra.mxu0 %v1219
    %1593 = vmatprep.mubr.bf16.mxu0 %v350
    %1594 = vmatmul.mubr.bf16.gmra.mrb[0].mxu0 %v349
    %v1595 = vpop.f32.mrb[0].mxu0
    %v1596 = vadd.f32 %v1555, %v1595
    %v1597 = vpop.f32.mrb[0].mxu0
    %v1598 = vadd.f32 %v1557, %v1597
    %v1599 = vpop.f32.mrb[0].mxu0
    %v1600 = vpop.f32.mrb[0].mxu0
    %1601 = vdwg.mxu0
    %1602 = vmatprep.subr.bf16.mxu0 %v1224
    %1603 = vmatpush1.bf16.msra.mxu0 %v1223
    %1604 = vmatprep.subr.bf16.mxu0 %v1228
    %1605 = vmatpush1.bf16.msra.mxu0 %v1227
    %1606 = vmatprep.subr.bf16.mxu0 %v1232
    %1607 = vmatpush1.bf16.msra.mxu0 %v1231
    %1608 = vmatprep.subr.bf16.mxu0 %v1236
    %1609 = vmatpush1.bf16.msra.mxu0 %v1235
    %1610 = vmatprep.subr.bf16.mxu0 %v1240
    %1611 = vmatpush1.bf16.msra.mxu0 %v1239
    %1612 = vmatprep.subr.bf16.mxu0 %v1244
    %1613 = vmatpush1.bf16.msra.mxu0 %v1243
    %1614 = vmatprep.subr.bf16.mxu0 %v1248
    %1615 = vmatpush1.bf16.msra.mxu0 %v1247
    %1616 = vmatprep.subr.bf16.mxu0 %v1252
    %1617 = vmatpush1.bf16.msra.mxu0 %v1251
    %1618 = vmatprep.subr.bf16.mxu0 0
    %1619 = vmatpush1.bf16.msra.mxu0 0
    %1620 = vmatprep.subr.bf16.mxu0 0
    %1621 = vmatpush1.bf16.msra.mxu0 0
    %1622 = vmatprep.subr.bf16.mxu0 0
    %1623 = vmatpush1.bf16.msra.mxu0 0
    %1624 = vmatprep.subr.bf16.mxu0 0
    %1625 = vmatpush1.bf16.msra.mxu0 0
    %1626 = vmatprep.subr.bf16.mxu0 0
    %1627 = vmatpush1.bf16.msra.mxu0 0
    %1628 = vmatprep.subr.bf16.mxu0 0
    %1629 = vmatpush1.bf16.msra.mxu0 0
    %1630 = vmatprep.subr.bf16.mxu0 0
    %1631 = vmatpush1.bf16.msra.mxu0 0
    %1632 = vmatprep.subr.bf16.mxu0 0
    %1633 = vmatpush1.bf16.msra.mxu0 0
    %1634 = vmatprep.mubr.bf16.mxu0 0
    %1635 = vmatmul.mubr.bf16.gmra.mrb[0].mxu0 %v351
    %v1636 = vpop.f32.mrb[0].mxu0
    %v1637 = vadd.f32 %v1596, %v1636
    %v1638 = vpop.f32.mrb[0].mxu0
    %v1639 = vadd.f32 %v1598, %v1638
    %v1640 = vpop.f32.mrb[0].mxu0
    %v1641 = vpop.f32.mrb[0].mxu0
    %1642 = vdwg.mxu0
    %1643 = vmatprep.subr.bf16.mxu0 %v1034
    %1644 = vmatpush1.bf16.msra.mxu0 %v1033
    %1645 = vmatprep.subr.bf16.mxu0 %v1038
    %1646 = vmatpush1.bf16.msra.mxu0 %v1037
    %1647 = vmatprep.subr.bf16.mxu0 %v1042
    %1648 = vmatpush1.bf16.msra.mxu0 %v1041
    %1649 = vmatprep.subr.bf16.mxu0 %v1046
    %1650 = vmatpush1.bf16.msra.mxu0 %v1045
    %1651 = vmatprep.subr.bf16.mxu0 %v1050
    %1652 = vmatpush1.bf16.msra.mxu0 %v1049
    %1653 = vmatprep.subr.bf16.mxu0 %v1054
    %1654 = vmatpush1.bf16.msra.mxu0 %v1053
    %1655 = vmatprep.subr.bf16.mxu0 %v1058
    %1656 = vmatpush1.bf16.msra.mxu0 %v1057
    %1657 = vmatprep.subr.bf16.mxu0 %v1062
    %1658 = vmatpush1.bf16.msra.mxu0 %v1061
    %1659 = vmatprep.subr.bf16.mxu0 %v1066
    %1660 = vmatpush1.bf16.msra.mxu0 %v1065
    %1661 = vmatprep.subr.bf16.mxu0 %v1070
    %1662 = vmatpush1.bf16.msra.mxu0 %v1069
    %1663 = vmatprep.subr.bf16.mxu0 %v1074
    %1664 = vmatpush1.bf16.msra.mxu0 %v1073
    %1665 = vmatprep.subr.bf16.mxu0 %v1078
    %1666 = vmatpush1.bf16.msra.mxu0 %v1077
    %1667 = vmatprep.subr.bf16.mxu0 %v1082
    %1668 = vmatpush1.bf16.msra.mxu0 %v1081
    %1669 = vmatprep.subr.bf16.mxu0 %v1086
    %1670 = vmatpush1.bf16.msra.mxu0 %v1085
    %1671 = vmatprep.subr.bf16.mxu0 %v1090
    %1672 = vmatpush1.bf16.msra.mxu0 %v1089
    %1673 = vmatprep.subr.bf16.mxu0 %v1094
    %1674 = vmatpush1.bf16.msra.mxu0 %v1093
    %1675 = vmatprep.mubr.bf16.mxu0 %v346
    %1676 = vmatmul.mubr.bf16.gmra.mrb[0].mxu0 %v345
    %v1677 = vpop.f32.mrb[0].mxu0
    %v1678 = vadd.f32 %v325, %v1677
    %v1679 = vpop.f32.mrb[0].mxu0
    %v1680 = vadd.f32 %v329, %v1679
    %v1681 = vpop.f32.mrb[0].mxu0
    %v1682 = vpop.f32.mrb[0].mxu0
    %1683 = vdwg.mxu0
    %1684 = vmatprep.subr.bf16.mxu0 %v1098
    %1685 = vmatpush1.bf16.msra.mxu0 %v1097
    %1686 = vmatprep.subr.bf16.mxu0 %v1102
    %1687 = vmatpush1.bf16.msra.mxu0 %v1101
    %1688 = vmatprep.subr.bf16.mxu0 %v1106
    %1689 = vmatpush1.bf16.msra.mxu0 %v1105
    %1690 = vmatprep.subr.bf16.mxu0 %v1110
    %1691 = vmatpush1.bf16.msra.mxu0 %v1109
    %1692 = vmatprep.subr.bf16.mxu0 %v1114
    %1693 = vmatpush1.bf16.msra.mxu0 %v1113
    %1694 = vmatprep.subr.bf16.mxu0 %v1118
    %1695 = vmatpush1.bf16.msra.mxu0 %v1117
    %1696 = vmatprep.subr.bf16.mxu0 %v1122
    %1697 = vmatpush1.bf16.msra.mxu0 %v1121
    %1698 = vmatprep.subr.bf16.mxu0 %v1126
    %1699 = vmatpush1.bf16.msra.mxu0 %v1125
    %1700 = vmatprep.subr.bf16.mxu0 %v1130
    %1701 = vmatpush1.bf16.msra.mxu0 %v1129
    %1702 = vmatprep.subr.bf16.mxu0 %v1134
    %1703 = vmatpush1.bf16.msra.mxu0 %v1133
    %1704 = vmatprep.subr.bf16.mxu0 %v1138
    %1705 = vmatpush1.bf16.msra.mxu0 %v1137
    %1706 = vmatprep.subr.bf16.mxu0 %v1142
    %1707 = vmatpush1.bf16.msra.mxu0 %v1141
    %1708 = vmatprep.subr.bf16.mxu0 %v1146
    %1709 = vmatpush1.bf16.msra.mxu0 %v1145
    %1710 = vmatprep.subr.bf16.mxu0 %v1150
    %1711 = vmatpush1.bf16.msra.mxu0 %v1149
    %1712 = vmatprep.subr.bf16.mxu0 %v1154
    %1713 = vmatpush1.bf16.msra.mxu0 %v1153
    %1714 = vmatprep.subr.bf16.mxu0 %v1158
    %1715 = vmatpush1.bf16.msra.mxu0 %v1157
    %1716 = vmatprep.mubr.bf16.mxu0 %v348
    %1717 = vmatmul.mubr.bf16.gmra.mrb[0].mxu0 %v347
    %v1718 = vpop.f32.mrb[0].mxu0
    %v1719 = vadd.f32 %v1678, %v1718
    %v1720 = vpop.f32.mrb[0].mxu0
    %v1721 = vadd.f32 %v1680, %v1720
    %v1722 = vpop.f32.mrb[0].mxu0
    %v1723 = vpop.f32.mrb[0].mxu0
    %1724 = vdwg.mxu0
    %1725 = vmatprep.subr.bf16.mxu0 %v1162
    %1726 = vmatpush1.bf16.msra.mxu0 %v1161
    %1727 = vmatprep.subr.bf16.mxu0 %v1166
    %1728 = vmatpush1.bf16.msra.mxu0 %v1165
    %1729 = vmatprep.subr.bf16.mxu0 %v1170
    %1730 = vmatpush1.bf16.msra.mxu0 %v1169
    %1731 = vmatprep.subr.bf16.mxu0 %v1174
    %1732 = vmatpush1.bf16.msra.mxu0 %v1173
    %1733 = vmatprep.subr.bf16.mxu0 %v1178
    %1734 = vmatpush1.bf16.msra.mxu0 %v1177
    %1735 = vmatprep.subr.bf16.mxu0 %v1182
    %1736 = vmatpush1.bf16.msra.mxu0 %v1181
    %1737 = vmatprep.subr.bf16.mxu0 %v1186
    %1738 = vmatpush1.bf16.msra.mxu0 %v1185
    %1739 = vmatprep.subr.bf16.mxu0 %v1190
    %1740 = vmatpush1.bf16.msra.mxu0 %v1189
    %1741 = vmatprep.subr.bf16.mxu0 %v1194
    %1742 = vmatpush1.bf16.msra.mxu0 %v1193
    %1743 = vmatprep.subr.bf16.mxu0 %v1198
    %1744 = vmatpush1.bf16.msra.mxu0 %v1197
    %1745 = vmatprep.subr.bf16.mxu0 %v1202
    %1746 = vmatpush1.bf16.msra.mxu0 %v1201
    %1747 = vmatprep.subr.bf16.mxu0 %v1206
    %1748 = vmatpush1.bf16.msra.mxu0 %v1205
    %1749 = vmatprep.subr.bf16.mxu0 %v1210
    %1750 = vmatpush1.bf16.msra.mxu0 %v1209
    %1751 = vmatprep.subr.bf16.mxu0 %v1214
    %1752 = vmatpush1.bf16.msra.mxu0 %v1213
    %1753 = vmatprep.subr.bf16.mxu0 %v1218
    %1754 = vmatpush1.bf16.msra.mxu0 %v1217
    %1755 = vmatprep.subr.bf16.mxu0 %v1222
    %1756 = vmatpush1.bf16.msra.mxu0 %v1221
    %1757 = vmatprep.mubr.bf16.mxu0 %v350
    %1758 = vmatmul.mubr.bf16.gmra.mrb[0].mxu0 %v349
    %v1759 = vpop.f32.mrb[0].mxu0
    %v1760 = vadd.f32 %v1719, %v1759
    %v1761 = vpop.f32.mrb[0].mxu0
    %v1762 = vadd.f32 %v1721, %v1761
    %v1763 = vpop.f32.mrb[0].mxu0
    %v1764 = vpop.f32.mrb[0].mxu0
    %1765 = vdwg.mxu0
    %1766 = vmatprep.subr.bf16.mxu0 %v1226
    %1767 = vmatpush1.bf16.msra.mxu0 %v1225
    %1768 = vmatprep.subr.bf16.mxu0 %v1230
    %1769 = vmatpush1.bf16.msra.mxu0 %v1229
    %1770 = vmatprep.subr.bf16.mxu0 %v1234
    %1771 = vmatpush1.bf16.msra.mxu0 %v1233
    %1772 = vmatprep.subr.bf16.mxu0 %v1238
    %1773 = vmatpush1.bf16.msra.mxu0 %v1237
    %1774 = vmatprep.subr.bf16.mxu0 %v1242
    %1775 = vmatpush1.bf16.msra.mxu0 %v1241
    %1776 = vmatprep.subr.bf16.mxu0 %v1246
    %1777 = vmatpush1.bf16.msra.mxu0 %v1245
    %1778 = vmatprep.subr.bf16.mxu0 %v1250
    %1779 = vmatpush1.bf16.msra.mxu0 %v1249
    %1780 = vmatprep.subr.bf16.mxu0 %v1254
    %1781 = vmatpush1.bf16.msra.mxu0 %v1253
    %1782 = vmatprep.subr.bf16.mxu0 0
    %1783 = vmatpush1.bf16.msra.mxu0 0
    %1784 = vmatprep.subr.bf16.mxu0 0
    %1785 = vmatpush1.bf16.msra.mxu0 0
    %1786 = vmatprep.subr.bf16.mxu0 0
    %1787 = vmatpush1.bf16.msra.mxu0 0
    %1788 = vmatprep.subr.bf16.mxu0 0
    %1789 = vmatpush1.bf16.msra.mxu0 0
    %1790 = vmatprep.subr.bf16.mxu0 0
    %1791 = vmatpush1.bf16.msra.mxu0 0
    %1792 = vmatprep.subr.bf16.mxu0 0
    %1793 = vmatpush1.bf16.msra.mxu0 0
    %1794 = vmatprep.subr.bf16.mxu0 0
    %1795 = vmatpush1.bf16.msra.mxu0 0
    %1796 = vmatprep.subr.bf16.mxu0 0
    %1797 = vmatpush1.bf16.msra.mxu0 0
    %1798 = vmatprep.mubr.bf16.mxu0 0
    %1799 = vmatmul.mubr.bf16.gmra.mrb[0].mxu0 %v351
    %v1800 = vpop.f32.mrb[0].mxu0
    %v1801 = vadd.f32 %v1760, %v1800
    %v1802 = vpop.f32.mrb[0].mxu0
    %v1803 = vadd.f32 %v1762, %v1802
    %v1804 = vpop.f32.mrb[0].mxu0
    %v1805 = vpop.f32.mrb[0].mxu0
    %1806 = vdwg.mxu0
    %v1807 = vmax.f32 %v1637, 0.0
    %v1808 = vmax.f32 %v1639, 0.0
    %v1809 = vmax.f32 %v1801, 0.0
    %v1810 = vmax.f32 %v1803, 0.0
    %v1811 = vpack.c.bf16 %v1807, %v1807
    %v1812 = vpack.c.bf16 %v1808, %v1808
    %v1813 = vpack.c.bf16 %v1809, %v1809
    %v1814 = vpack.c.bf16 %v1810, %v1810
    %v1815 = vld [vmem:[#allocation8] sm:$0xf]
    %v1816 = vld [vmem:[#allocation8 + $0x4] sm:$0xf]
    %v1817 = vld [vmem:[#allocation8 + $0x8] sm:$0xf]
    %v1818 = vld [vmem:[#allocation8 + $0xc] sm:$0xf]
    %v1819 = vld [vmem:[#allocation8 + $0x10] sm:$0xf]
    %v1820 = vld [vmem:[#allocation8 + $0x14] sm:$0xf]
    %v1821 = vld [vmem:[#allocation8 + $0x18] sm:$0xf]
    %v1822 = vld [vmem:[#allocation8 + $0x1c] sm:$0xf]
    %v1823 = vld [vmem:[#allocation8 + $0x20] sm:$0xf]
    %v1824 = vld [vmem:[#allocation8 + $0x24] sm:$0xf]
    %v1825 = vld [vmem:[#allocation8 + $0x28] sm:$0xf]
    %v1826 = vld [vmem:[#allocation8 + $0x2c] sm:$0xf]
    %v1827 = vld [vmem:[#allocation8 + $0x30] sm:$0xf]
    %v1828 = vld [vmem:[#allocation8 + $0x34] sm:$0xf]
    %v1829 = vld [vmem:[#allocation8 + $0x38] sm:$0xf]
    %v1830 = vld [vmem:[#allocation8 + $0x3c] sm:$0xf]
    %v1831 = vld [vmem:[#allocation8 + $0x40] sm:$0xf]
    %v1832 = vld [vmem:[#allocation8 + $0x44] sm:$0xf]
    %v1833 = vld [vmem:[#allocation8 + $0x48] sm:$0xf]
    %v1834 = vld [vmem:[#allocation8 + $0x4c] sm:$0xf]
    %v1835 = vld [vmem:[#allocation8 + $0x50] sm:$0xf]
    %v1836 = vld [vmem:[#allocation8 + $0x54] sm:$0xf]
    %v1837 = vld [vmem:[#allocation8 + $0x58] sm:$0xf]
    %v1838 = vld [vmem:[#allocation8 + $0x5c] sm:$0xf]
    %v1839 = vld [vmem:[#allocation8 + $0x60] sm:$0xf]
    %v1840 = vld [vmem:[#allocation8 + $0x64] sm:$0xf]
    %v1841 = vld [vmem:[#allocation8 + $0x68] sm:$0xf]
    %v1842 = vld [vmem:[#allocation8 + $0x6c] sm:$0xf]
    %v1843 = vld [vmem:[#allocation8 + $0x70] sm:$0xf]
    %v1844 = vld [vmem:[#allocation8 + $0x74] sm:$0xf]
    %v1845 = vld [vmem:[#allocation8 + $0x78] sm:$0xf]
    %v1846 = vld [vmem:[#allocation8 + $0x7c] sm:$0xf]
    %v1847 = vld [vmem:[#allocation8 + $0x80] sm:$0xf]
    %v1848 = vld [vmem:[#allocation8 + $0x84] sm:$0xf]
    %v1849 = vld [vmem:[#allocation8 + $0x88] sm:$0xf]
    %v1850 = vld [vmem:[#allocation8 + $0x8c] sm:$0xf]
    %v1851 = vld [vmem:[#allocation8 + $0x90] sm:$0xf]
    %v1852 = vld [vmem:[#allocation8 + $0x94] sm:$0xf]
    %v1853 = vld [vmem:[#allocation8 + $0x98] sm:$0xf]
    %v1854 = vld [vmem:[#allocation8 + $0x9c] sm:$0xf]
    %v1855 = vld [vmem:[#allocation8 + $0xa0] sm:$0xf]
    %v1856 = vld [vmem:[#allocation8 + $0xa4] sm:$0xf]
    %v1857 = vld [vmem:[#allocation8 + $0xa8] sm:$0xf]
    %v1858 = vld [vmem:[#allocation8 + $0xac] sm:$0xf]
    %v1859 = vld [vmem:[#allocation8 + $0xb0] sm:$0xf]
    %v1860 = vld [vmem:[#allocation8 + $0xb4] sm:$0xf]
    %v1861 = vld [vmem:[#allocation8 + $0xb8] sm:$0xf]
    %v1862 = vld [vmem:[#allocation8 + $0xbc] sm:$0xf]
    %v1863 = vld [vmem:[#allocation8 + $0xc0] sm:$0xf]
    %v1864 = vld [vmem:[#allocation8 + $0xc4] sm:$0xf]
    %v1865 = vld [vmem:[#allocation8 + $0xc8] sm:$0xf]
    %v1866 = vld [vmem:[#allocation8 + $0xcc] sm:$0xf]
    %v1867 = vld [vmem:[#allocation8 + $0xd0] sm:$0xf]
    %v1868 = vld [vmem:[#allocation8 + $0xd4] sm:$0xf]
    %v1869 = vld [vmem:[#allocation8 + $0xd8] sm:$0xf]
    %v1870 = vld [vmem:[#allocation8 + $0xdc] sm:$0xf]
    %v1871 = vld [vmem:[#allocation8 + $0xe0] sm:$0xf]
    %v1872 = vld [vmem:[#allocation8 + $0xe4] sm:$0xf]
    %v1873 = vld [vmem:[#allocation8 + $0xe8] sm:$0xf]
    %v1874 = vld [vmem:[#allocation8 + $0xec] sm:$0xf]
    %v1875 = vld [vmem:[#allocation8 + $0xf0] sm:$0xf]
    %v1876 = vld [vmem:[#allocation8 + $0xf4] sm:$0xf]
    %v1877 = vld [vmem:[#allocation8 + $0xf8] sm:$0xf]
    %v1878 = vld [vmem:[#allocation8 + $0xfc] sm:$0xf]
    %v1879 = vld [vmem:[#allocation10] sm:$0x1]
    %v1881 = vlaneseq
    %v1882 = vshrl.u32 %v1881, 7
    %v1883 = vsub.s32 0, %v1882
    %v1884 = vrot.slane %v1879, %v1883
    %v1950 = vunpack.c.l.b16 %v1815
    %v1951 = vunpack.c.l.b16 %v1816
    %v1952 = vunpack.c.l.b16 %v1817
    %v1953 = vunpack.c.l.b16 %v1818
    %v1954 = vunpack.c.l.b16 %v1819
    %v1955 = vunpack.c.l.b16 %v1820
    %v1956 = vunpack.c.l.b16 %v1821
    %v1957 = vunpack.c.l.b16 %v1822
    %v1958 = vunpack.c.l.b16 %v1823
    %v1959 = vunpack.c.l.b16 %v1824
    %v1960 = vunpack.c.l.b16 %v1825
    %v1961 = vunpack.c.l.b16 %v1826
    %v1962 = vunpack.c.l.b16 %v1827
    %v1963 = vunpack.c.l.b16 %v1828
    %v1964 = vunpack.c.l.b16 %v1829
    %v1965 = vunpack.c.l.b16 %v1830
    %v1966 = vunpack.c.l.b16 %v1831
    %v1967 = vunpack.c.l.b16 %v1832
    %v1968 = vunpack.c.l.b16 %v1833
    %v1969 = vunpack.c.l.b16 %v1834
    %v1970 = vunpack.c.l.b16 %v1835
    %v1971 = vunpack.c.l.b16 %v1836
    %v1972 = vunpack.c.l.b16 %v1837
    %v1973 = vunpack.c.l.b16 %v1838
    %v1974 = vunpack.c.l.b16 %v1839
    %v1975 = vunpack.c.l.b16 %v1840
    %v1976 = vunpack.c.l.b16 %v1841
    %v1977 = vunpack.c.l.b16 %v1842
    %v1978 = vunpack.c.l.b16 %v1843
    %v1979 = vunpack.c.l.b16 %v1844
    %v1980 = vunpack.c.l.b16 %v1845
    %v1981 = vunpack.c.l.b16 %v1846
    %v1982 = vunpack.c.l.b16 %v1847
    %v1983 = vunpack.c.l.b16 %v1848
    %v1984 = vunpack.c.l.b16 %v1849
    %v1985 = vunpack.c.l.b16 %v1850
    %v1986 = vunpack.c.l.b16 %v1851
    %v1987 = vunpack.c.l.b16 %v1852
    %v1988 = vunpack.c.l.b16 %v1853
    %v1989 = vunpack.c.l.b16 %v1854
    %v1990 = vunpack.c.l.b16 %v1855
    %v1991 = vunpack.c.l.b16 %v1856
    %v1992 = vunpack.c.l.b16 %v1857
    %v1993 = vunpack.c.l.b16 %v1858
    %v1994 = vunpack.c.l.b16 %v1859
    %v1995 = vunpack.c.l.b16 %v1860
    %v1996 = vunpack.c.l.b16 %v1861
    %v1997 = vunpack.c.l.b16 %v1862
    %v1998 = vunpack.c.l.b16 %v1863
    %v1999 = vunpack.c.l.b16 %v1864
    %v2000 = vunpack.c.l.b16 %v1865
    %v2001 = vunpack.c.l.b16 %v1866
    %v2002 = vunpack.c.l.b16 %v1867
    %v2003 = vunpack.c.l.b16 %v1868
    %v2004 = vunpack.c.l.b16 %v1869
    %v2005 = vunpack.c.l.b16 %v1870
    %v2006 = vunpack.c.l.b16 %v1871
    %v2007 = vunpack.c.l.b16 %v1872
    %v2008 = vunpack.c.l.b16 %v1873
    %v2009 = vunpack.c.l.b16 %v1874
    %v2010 = vunpack.c.l.b16 %v1875
    %v2011 = vunpack.c.l.b16 %v1876
    %v2012 = vunpack.c.l.b16 %v1877
    %v2013 = vunpack.c.l.b16 %v1878
    %v2014 = vpack.c.b16 %v1951, %v1950
    %v2015 = vpack.c.b16 %v1953, %v1952
    %v2016 = vpack.c.b16 %v1955, %v1954
    %v2017 = vpack.c.b16 %v1957, %v1956
    %v2018 = vpack.c.b16 %v1959, %v1958
    %v2019 = vpack.c.b16 %v1961, %v1960
    %v2020 = vpack.c.b16 %v1963, %v1962
    %v2021 = vpack.c.b16 %v1965, %v1964
    %v2022 = vpack.c.b16 %v1967, %v1966
    %v2023 = vpack.c.b16 %v1969, %v1968
    %v2024 = vpack.c.b16 %v1971, %v1970
    %v2025 = vpack.c.b16 %v1973, %v1972
    %v2026 = vpack.c.b16 %v1975, %v1974
    %v2027 = vpack.c.b16 %v1977, %v1976
    %v2028 = vpack.c.b16 %v1979, %v1978
    %v2029 = vpack.c.b16 %v1981, %v1980
    %v2030 = vpack.c.b16 %v1983, %v1982
    %v2031 = vpack.c.b16 %v1985, %v1984
    %v2032 = vpack.c.b16 %v1987, %v1986
    %v2033 = vpack.c.b16 %v1989, %v1988
    %v2034 = vpack.c.b16 %v1991, %v1990
    %v2035 = vpack.c.b16 %v1993, %v1992
    %v2036 = vpack.c.b16 %v1995, %v1994
    %v2037 = vpack.c.b16 %v1997, %v1996
    %v2038 = vpack.c.b16 %v1999, %v1998
    %v2039 = vpack.c.b16 %v2001, %v2000
    %v2040 = vpack.c.b16 %v2003, %v2002
    %v2041 = vpack.c.b16 %v2005, %v2004
    %v2042 = vpack.c.b16 %v2007, %v2006
    %v2043 = vpack.c.b16 %v2009, %v2008
    %v2044 = vpack.c.b16 %v2011, %v2010
    %v2045 = vpack.c.b16 %v2013, %v2012
    %2078 = vmatprep.subr.bf16.mxu0 0
    %2079 = vmatpush1.bf16.msra.mxu0 %v2014
    %2080 = vmatprep.subr.bf16.mxu0 0
    %2081 = vmatpush1.bf16.msra.mxu0 %v2015
    %2082 = vmatprep.subr.bf16.mxu0 0
    %2083 = vmatpush1.bf16.msra.mxu0 %v2016
    %2084 = vmatprep.subr.bf16.mxu0 0
    %2085 = vmatpush1.bf16.msra.mxu0 %v2017
    %2086 = vmatprep.subr.bf16.mxu0 0
    %2087 = vmatpush1.bf16.msra.mxu0 %v2018
    %2088 = vmatprep.subr.bf16.mxu0 0
    %2089 = vmatpush1.bf16.msra.mxu0 %v2019
    %2090 = vmatprep.subr.bf16.mxu0 0
    %2091 = vmatpush1.bf16.msra.mxu0 %v2020
    %2092 = vmatprep.subr.bf16.mxu0 0
    %2093 = vmatpush1.bf16.msra.mxu0 %v2021
    %2094 = vmatprep.subr.bf16.mxu0 0
    %2095 = vmatpush1.bf16.msra.mxu0 %v2022
    %2096 = vmatprep.subr.bf16.mxu0 0
    %2097 = vmatpush1.bf16.msra.mxu0 %v2023
    %2098 = vmatprep.subr.bf16.mxu0 0
    %2099 = vmatpush1.bf16.msra.mxu0 %v2024
    %2100 = vmatprep.subr.bf16.mxu0 0
    %2101 = vmatpush1.bf16.msra.mxu0 %v2025
    %2102 = vmatprep.subr.bf16.mxu0 0
    %2103 = vmatpush1.bf16.msra.mxu0 %v2026
    %2104 = vmatprep.subr.bf16.mxu0 0
    %2105 = vmatpush1.bf16.msra.mxu0 %v2027
    %2106 = vmatprep.subr.bf16.mxu0 0
    %2107 = vmatpush1.bf16.msra.mxu0 %v2028
    %2108 = vmatprep.subr.bf16.mxu0 0
    %2109 = vmatpush1.bf16.msra.mxu0 %v2029
    %2110 = vmatprep.mubr.bf16.mxu0 %v1812
    %2111 = vmatmul.mubr.bf16.gmra.mrb[0].mxu0 %v1811
    %v2112 = vpop.f32.mrb[0].mxu0
    %v2113 = vadd.f32 %v1884, %v2112
    %v2114 = vpop.f32.mrb[0].mxu0
    %v2115 = vpop.f32.mrb[0].mxu0
    %v2116 = vpop.f32.mrb[0].mxu0
    %2117 = vdwg.mxu0
    %2118 = vmatprep.subr.bf16.mxu0 0
    %2119 = vmatpush1.bf16.msra.mxu0 %v2030
    %2120 = vmatprep.subr.bf16.mxu0 0
    %2121 = vmatpush1.bf16.msra.mxu0 %v2031
    %2122 = vmatprep.subr.bf16.mxu0 0
    %2123 = vmatpush1.bf16.msra.mxu0 %v2032
    %2124 = vmatprep.subr.bf16.mxu0 0
    %2125 = vmatpush1.bf16.msra.mxu0 %v2033
    %2126 = vmatprep.subr.bf16.mxu0 0
    %2127 = vmatpush1.bf16.msra.mxu0 %v2034
    %2128 = vmatprep.subr.bf16.mxu0 0
    %2129 = vmatpush1.bf16.msra.mxu0 %v2035
    %2130 = vmatprep.subr.bf16.mxu0 0
    %2131 = vmatpush1.bf16.msra.mxu0 %v2036
    %2132 = vmatprep.subr.bf16.mxu0 0
    %2133 = vmatpush1.bf16.msra.mxu0 %v2037
    %2134 = vmatprep.subr.bf16.mxu0 0
    %2135 = vmatpush1.bf16.msra.mxu0 %v2038
    %2136 = vmatprep.subr.bf16.mxu0 0
    %2137 = vmatpush1.bf16.msra.mxu0 %v2039
    %2138 = vmatprep.subr.bf16.mxu0 0
    %2139 = vmatpush1.bf16.msra.mxu0 %v2040
    %2140 = vmatprep.subr.bf16.mxu0 0
    %2141 = vmatpush1.bf16.msra.mxu0 %v2041
    %2142 = vmatprep.subr.bf16.mxu0 0
    %2143 = vmatpush1.bf16.msra.mxu0 %v2042
    %2144 = vmatprep.subr.bf16.mxu0 0
    %2145 = vmatpush1.bf16.msra.mxu0 %v2043
    %2146 = vmatprep.subr.bf16.mxu0 0
    %2147 = vmatpush1.bf16.msra.mxu0 %v2044
    %2148 = vmatprep.subr.bf16.mxu0 0
    %2149 = vmatpush1.bf16.msra.mxu0 %v2045
    %2150 = vmatprep.mubr.bf16.mxu0 %v1814
    %2151 = vmatmul.mubr.bf16.gmra.mrb[0].mxu0 %v1813
    %v2152 = vpop.f32.mrb[0].mxu0
    %v2153 = vadd.f32 %v2113, %v2152
    %v2154 = vpop.f32.mrb[0].mxu0
    %v2155 = vpop.f32.mrb[0].mxu0
    %v2156 = vpop.f32.mrb[0].mxu0
    %2157 = vdwg.mxu0
    %2158 = vst [vmem:[#allocation11] sm:$0xff] %v2153
    // Predicated region
    $region42: #{tpu_custom_call.1} parent=1 // pred_check
      _
    $region43: #{tpu_custom_call.1} parent=1 // pred_check_branch
      %2160 = sbr.rel (0) target = $region45
    $region44: #{tpu_custom_call.1} parent=1 // pred_region
      %s2162 = ssub.s32 128, 128
      %2163 = vsyncadd [#allocation4], %s2162
      %s2165 = sshll.u32 [#allocation11], 4
      %s2166 = int_to_ptr.vmem [resolvable:$true] %s2165
      %2168 = dma.vmem_to_hbm [thread:$0]  %s2166, 128, %s5, [#allocation4]
    $region45: #{tpu_custom_call.1} parent=1 // pred_fallthru
      _
    // Predicated region
    $region46: #{tpu_custom_call.1} parent=1 // pred_check
      _
    $region47: #{tpu_custom_call.1} parent=1 // pred_check_branch
      %2170 = sbr.rel (0) target = $region49
    $region48: #{tpu_custom_call.1} parent=1 // pred_region
      %2171 = dma.done [#allocation4], 128
    $region49: #{tpu_custom_call.1} parent=1 // pred_fallthru
      _
    %2172 = vsyncpa [#allocation3], 1
    %2173 = vsyncpa [#allocation6], 1
    %2174 = vsyncpa [#allocation9], 1
    %2175 = vsyncpa [#allocation4], 1

</llo_original>
